<compile_context>
chip_gen: v5e
topology: v5e:2x2
jax: 0.10.0
libtpu: 0.0.40
codegen_flags: <defaults>
</compile_context>

<pallas_src>
import functools

import jax
import jax.numpy as jnp
from jax.experimental import pallas as pl
from jax.experimental.pallas import tpu as pltpu

INPUT_SIZE = 28 * 28          # 784, as in the module
# TODO(synk): hidden_layer_sizes comes from an undefined external dict `clf`;
#             fixed to (128, 64) here.
HIDDEN_SIZES = (128, 64)
OUTPUT_SIZE = 10

H1 = HIDDEN_SIZES[0]          # 128 (already lane-dense)
H2_PAD = 128                  # 64  -> 128 (zero-padded)
OUT_PAD = 128                 # 10  -> 128 (zero-padded, lane-dense store)

MAX_TILE_B = 1024             # 1024-row f32 x tiles fit v5e's 16 MiB scoped VMEM


def mlp_kernel(x_ref, w1_ref, b1_ref, w2_ref, b2_ref, w3_ref, b3_ref, o_ref):
    # fc1 + ReLU: bf16 operands on the MXU, f32 accumulate / bias / ReLU.
    x = x_ref[...].astype(jnp.bfloat16)
    h1 = jnp.dot(x, w1_ref[...], preferred_element_type=jnp.float32)
    h1 = jnp.maximum(h1 + b1_ref[...], 0.0)
    # fc2 + ReLU (padded hidden columns stay exactly 0: zero weights + zero bias).
    h2 = jnp.dot(h1.astype(jnp.bfloat16), w2_ref[...],
                 preferred_element_type=jnp.float32)
    h2 = jnp.maximum(h2 + b2_ref[...], 0.0)
    # fc3 (no activation).
    out = jnp.dot(h2.astype(jnp.bfloat16), w3_ref[...],
                  preferred_element_type=jnp.float32) + b3_ref[...]
    o_ref[...] = out


def _round_up(n, m):
    return ((n + m - 1) // m) * m


def _pick_tile_b(batch):
    """Rows per grid step: an even, balanced tile count (keeps both v7x TCs busy)
    with each tile capped at MAX_TILE_B rows (v5e scoped-VMEM headroom)."""
    pairs = max(1, pl.cdiv(batch, 2 * MAX_TILE_B))
    return max(8, _round_up(pl.cdiv(batch, 2 * pairs), 8))


@functools.partial(jax.jit, static_argnames=("tile_b",))
def _mlp_forward(x, kernel_params, *, tile_b):
    """x: (B, INPUT_SIZE) f32, unpadded. kernel_params: bf16 weights / f32 biases,
    hidden/output lane dims zero-padded to 128."""
    w1, b1, w2, b2, w3, b3 = kernel_params
    B = x.shape[0]
    n_tiles = pl.cdiv(B, tile_b)

    def resident(shape):
        # Same block index every grid step -> stays resident in VMEM.
        return pl.BlockSpec(shape, lambda i: (0, 0))

    flops = 2 * B * (INPUT_SIZE * H1 + H1 * H2_PAD + H2_PAD * OUT_PAD)
    bytes_accessed = (
        4 * (x.size + B * OUT_PAD)                    # f32 activations
        + 2 * (w1.size + w2.size + w3.size)           # bf16 weights
        + 4 * (b1.size + b2.size + b3.size))          # f32 biases

    out_pad = pl.pallas_call(
        mlp_kernel,
        out_shape=jax.ShapeDtypeStruct((B, OUT_PAD), jnp.float32),
        grid=(n_tiles,),
        in_specs=[
            # Unpadded x: block last dim == full array dim (784); ragged last
            # batch tile handled by Pallas partial blocks (rows independent).
            pl.BlockSpec((tile_b, INPUT_SIZE), lambda i: (i, 0)),
            resident(w1.shape), resident(b1.shape),
            resident(w2.shape), resident(b2.shape),
            resident(w3.shape), resident(b3.shape),
        ],
        out_specs=pl.BlockSpec((tile_b, OUT_PAD), lambda i: (i, 0)),
        compiler_params=pltpu.CompilerParams(
            dimension_semantics=("parallel",),  # shard batch tiles across TCs on v7x
        ),
        cost_estimate=pl.CostEstimate(
            flops=flops, bytes_accessed=bytes_accessed, transcendentals=0),
    )(x, w1, b1, w2, b2, w3, b3)

    # Strip lane padding back to the logical (B, 10) output (out-of-range batch
    # rows of the last partial block were never written to HBM).
    return out_pad[:, :OUTPUT_SIZE]


def mlp_forward(x, kernel_params):
    return _mlp_forward(x, kernel_params, tile_b=_pick_tile_b(x.shape[0]))


def init_params(key):
    """Logical (unpadded, f32) params; PyTorch nn.Linear default init
    U(-1/sqrt(fan_in), +1/sqrt(fan_in)); weights stored (in, out)."""
    def linear(key, fan_in, fan_out):
        kw, kb = jax.random.split(key)
        bound = 1.0 / jnp.sqrt(fan_in)
        w = jax.random.uniform(kw, (fan_in, fan_out), jnp.float32, -bound, bound)
        b = jax.random.uniform(kb, (1, fan_out), jnp.float32, -bound, bound)
        return w, b

    k1, k2, k3 = jax.random.split(key, 3)
    w1, b1 = linear(k1, INPUT_SIZE, HIDDEN_SIZES[0])
    w2, b2 = linear(k2, HIDDEN_SIZES[0], HIDDEN_SIZES[1])
    w3, b3 = linear(k3, HIDDEN_SIZES[1], OUTPUT_SIZE)
    return (w1, b1, w2, b2, w3, b3)


def prepare_kernel_params(params):
    """One-time offline prep: store weights in bf16 and zero-pad the hidden (64)
    and output (10) lane dims to 128. Biases stay f32 (bias+ReLU run in f32)."""
    w1, b1, w2, b2, w3, b3 = params

    def pad2(a, rows, cols, dtype):
        out = jnp.zeros((rows, cols), dtype)
        return out.at[:a.shape[0], :a.shape[1]].set(a.astype(dtype))

    return (
        w1.astype(jnp.bfloat16), b1,                         # (784,128) bf16, (1,128) f32
        pad2(w2, H1, H2_PAD, jnp.bfloat16), pad2(b2, 1, H2_PAD, jnp.float32),
        pad2(w3, H2_PAD, OUT_PAD, jnp.bfloat16), pad2(b3, 1, OUT_PAD, jnp.float32),
    )


def reference_forward(x, params):
    """f32 oracle of the PyTorch forward (HIGHEST precision matmuls)."""
    w1, b1, w2, b2, w3, b3 = params
    hp = jax.lax.Precision.HIGHEST
    h1 = jnp.maximum(jnp.dot(x, w1, precision=hp) + b1, 0.0)
    h2 = jnp.maximum(jnp.dot(h1, w2, precision=hp) + b2, 0.0)
    return jnp.dot(h2, w3, precision=hp) + b3


if __name__ == "__main__":
    key = jax.random.PRNGKey(0)
    kx, kp = jax.random.split(key)

    batch = 300  # not a multiple of tile_b -> exercises the ragged last tile + 2-tile grid
    x = jax.random.normal(kx, (batch, INPUT_SIZE), jnp.float32)

    params = init_params(kp)                       # logical f32 params (reference)
    kernel_params = prepare_kernel_params(params)  # bf16 / lane-padded (kernel)

    out = mlp_forward(x, kernel_params)
    out = jax.block_until_ready(out)

    ref = reference_forward(x, params)
    assert out.shape == (batch, OUTPUT_SIZE)
    # bf16 matmul operands with f32 accumulation over K<=784: ~1e-2-level abs error.
    assert jnp.allclose(out, ref, atol=5e-2, rtol=5e-2), float(jnp.max(jnp.abs(out - ref)))
    print("KERNEL_OK")
</pallas_src>

<mosaic_0001>
module attributes {stable_mosaic.version = 11 : i64} {
  func.func @mlp_kernel(%arg0: i32, %arg1: memref<152x784xf32, #tpu.memory_space<vmem>>, %arg2: memref<784x128xbf16, #tpu.memory_space<vmem>>, %arg3: memref<1x128xf32, #tpu.memory_space<vmem>>, %arg4: memref<128x128xbf16, #tpu.memory_space<vmem>>, %arg5: memref<1x128xf32, #tpu.memory_space<vmem>>, %arg6: memref<128x128xbf16, #tpu.memory_space<vmem>>, %arg7: memref<1x128xf32, #tpu.memory_space<vmem>>, %arg8: memref<152x128xf32, #tpu.memory_space<vmem>>) attributes {dimension_semantics = [#tpu.dimension_semantics<parallel>], iteration_bounds = array<i64: 2>, scalar_prefetch = 0 : i64, scratch_operands = 0 : i64, tpu.core_type = #tpu.core_type<tc>, window_params = [{transform_indices = @transform_0, window_bounds = array<i64: 152, 784>}, {pipeline_mode = #tpu.pipeline_mode<synchronous>, transform_indices = @transform_1, window_bounds = array<i64: 784, 128>}, {pipeline_mode = #tpu.pipeline_mode<synchronous>, transform_indices = @transform_2, window_bounds = array<i64: 1, 128>}, {pipeline_mode = #tpu.pipeline_mode<synchronous>, transform_indices = @transform_3, window_bounds = array<i64: 128, 128>}, {pipeline_mode = #tpu.pipeline_mode<synchronous>, transform_indices = @transform_4, window_bounds = array<i64: 1, 128>}, {pipeline_mode = #tpu.pipeline_mode<synchronous>, transform_indices = @transform_5, window_bounds = array<i64: 128, 128>}, {pipeline_mode = #tpu.pipeline_mode<synchronous>, transform_indices = @transform_6, window_bounds = array<i64: 1, 128>}, {transform_indices = @transform_7, window_bounds = array<i64: 152, 128>}]} {
    %c0 = arith.constant 0 : index
    %c0_0 = arith.constant 0 : index
    %0 = vector.load %arg1[%c0, %c0_0] : memref<152x784xf32, #tpu.memory_space<vmem>>, vector<152x784xf32>
    %1 = arith.truncf %0 : vector<152x784xf32> to vector<152x784xbf16>
    %c0_1 = arith.constant 0 : index
    %c0_2 = arith.constant 0 : index
    %2 = vector.load %arg2[%c0_1, %c0_2] : memref<784x128xbf16, #tpu.memory_space<vmem>>, vector<784x128xbf16>
    %cst = arith.constant dense<0.000000e+00> : vector<152x128xf32>
    %3 = tpu.matmul %1, %2, %cst {dimension_numbers = #tpu.dot_dimension_numbers<[1], [0], [0], [1], [0, 0, 1, 1], [], []>} : vector<152x784xbf16>, vector<784x128xbf16>, vector<152x128xf32> -> vector<152x128xf32>
    %c0_3 = arith.constant 0 : index
    %c0_4 = arith.constant 0 : index
    %4 = vector.load %arg3[%c0_3, %c0_4] : memref<1x128xf32, #tpu.memory_space<vmem>>, vector<1x128xf32>
    %5 = vector.broadcast %4 : vector<1x128xf32> to vector<152x128xf32>
    %6 = arith.addf %3, %5 : vector<152x128xf32>
    %cst_5 = arith.constant 0.000000e+00 : f32
    %7 = vector.broadcast %cst_5 : f32 to vector<152x128xf32>
    %8 = arith.maximumf %6, %7 : vector<152x128xf32>
    %9 = arith.truncf %8 : vector<152x128xf32> to vector<152x128xbf16>
    %c0_6 = arith.constant 0 : index
    %c0_7 = arith.constant 0 : index
    %10 = vector.load %arg4[%c0_6, %c0_7] : memref<128x128xbf16, #tpu.memory_space<vmem>>, vector<128x128xbf16>
    %cst_8 = arith.constant dense<0.000000e+00> : vector<152x128xf32>
    %11 = tpu.matmul %9, %10, %cst_8 {dimension_numbers = #tpu.dot_dimension_numbers<[1], [0], [0], [1], [0, 0, 1, 1], [], []>} : vector<152x128xbf16>, vector<128x128xbf16>, vector<152x128xf32> -> vector<152x128xf32>
    %c0_9 = arith.constant 0 : index
    %c0_10 = arith.constant 0 : index
    %12 = vector.load %arg5[%c0_9, %c0_10] : memref<1x128xf32, #tpu.memory_space<vmem>>, vector<1x128xf32>
    %13 = vector.broadcast %12 : vector<1x128xf32> to vector<152x128xf32>
    %14 = arith.addf %11, %13 : vector<152x128xf32>
    %cst_11 = arith.constant 0.000000e+00 : f32
    %15 = vector.broadcast %cst_11 : f32 to vector<152x128xf32>
    %16 = arith.maximumf %14, %15 : vector<152x128xf32>
    %17 = arith.truncf %16 : vector<152x128xf32> to vector<152x128xbf16>
    %c0_12 = arith.constant 0 : index
    %c0_13 = arith.constant 0 : index
    %18 = vector.load %arg6[%c0_12, %c0_13] : memref<128x128xbf16, #tpu.memory_space<vmem>>, vector<128x128xbf16>
    %cst_14 = arith.constant dense<0.000000e+00> : vector<152x128xf32>
    %19 = tpu.matmul %17, %18, %cst_14 {dimension_numbers = #tpu.dot_dimension_numbers<[1], [0], [0], [1], [0, 0, 1, 1], [], []>} : vector<152x128xbf16>, vector<128x128xbf16>, vector<152x128xf32> -> vector<152x128xf32>
    %c0_15 = arith.constant 0 : index
    %c0_16 = arith.constant 0 : index
    %20 = vector.load %arg7[%c0_15, %c0_16] : memref<1x128xf32, #tpu.memory_space<vmem>>, vector<1x128xf32>
    %21 = vector.broadcast %20 : vector<1x128xf32> to vector<152x128xf32>
    %22 = arith.addf %19, %21 : vector<152x128xf32>
    %c0_17 = arith.constant 0 : index
    %c0_18 = arith.constant 0 : index
    %23 = vector.load %arg8[%c0_17, %c0_18] : memref<152x128xf32, #tpu.memory_space<vmem>>, vector<152x128xf32>
    tpu.vector_store %arg8[%c0_17, %c0_18], %22 {strides = array<i32>} : memref<152x128xf32, #tpu.memory_space<vmem>>, vector<152x128xf32>,
    return
  }
  func.func @transform_0(%arg0: i32) -> (i32, i32) {
    %c0_i32 = arith.constant 0 : i32
    %c0_i32_0 = arith.constant 0 : i32
    return %arg0, %c0_i32 : i32, i32
  }
  func.func @transform_1(%arg0: i32) -> (i32, i32) {
    %c0_i32 = arith.constant 0 : i32
    %c0_i32_0 = arith.constant 0 : i32
    %c0_i32_1 = arith.constant 0 : i32
    return %c0_i32, %c0_i32_0 : i32, i32
  }
  func.func @transform_2(%arg0: i32) -> (i32, i32) {
    %c0_i32 = arith.constant 0 : i32
    %c0_i32_0 = arith.constant 0 : i32
    %c0_i32_1 = arith.constant 0 : i32
    return %c0_i32, %c0_i32_0 : i32, i32
  }
  func.func @transform_3(%arg0: i32) -> (i32, i32) {
    %c0_i32 = arith.constant 0 : i32
    %c0_i32_0 = arith.constant 0 : i32
    %c0_i32_1 = arith.constant 0 : i32
    return %c0_i32, %c0_i32_0 : i32, i32
  }
  func.func @transform_4(%arg0: i32) -> (i32, i32) {
    %c0_i32 = arith.constant 0 : i32
    %c0_i32_0 = arith.constant 0 : i32
    %c0_i32_1 = arith.constant 0 : i32
    return %c0_i32, %c0_i32_0 : i32, i32
  }
  func.func @transform_5(%arg0: i32) -> (i32, i32) {
    %c0_i32 = arith.constant 0 : i32
    %c0_i32_0 = arith.constant 0 : i32
    %c0_i32_1 = arith.constant 0 : i32
    return %c0_i32, %c0_i32_0 : i32, i32
  }
  func.func @transform_6(%arg0: i32) -> (i32, i32) {
    %c0_i32 = arith.constant 0 : i32
    %c0_i32_0 = arith.constant 0 : i32
    %c0_i32_1 = arith.constant 0 : i32
    return %c0_i32, %c0_i32_0 : i32, i32
  }
  func.func @transform_7(%arg0: i32) -> (i32, i32) {
    %c0_i32 = arith.constant 0 : i32
    %c0_i32_0 = arith.constant 0 : i32
    return %arg0, %c0_i32 : i32, i32
  }
}

</mosaic_0001>

<llo_original>
// kernel: _mlp_forward.1
$region0: #{_mlp_forward.1}
  #allocation0 [shape = 'u32[]', space=smem, size = 0x4, offset = 0x4, fixed_abs, tag = 'smem constant byte address 0x4 - core index']
  #allocation1 [shape = 'u32[72,128]{1,0:T(1,128)}', space=vmem, size = 0x9000, scoped, tag = 'internal scratch']
  %s0 = inlined_call_operand.hbm [shape: f32[300,784], index: 0, kind: input, shape index: {}]
  %s1 = inlined_call_operand.hbm [shape: bf16[784,128], index: 1, kind: input, shape index: {}]
  %s2 = inlined_call_operand.hbm [shape: f32[1,128], index: 2, kind: input, shape index: {}]
  %s3 = inlined_call_operand.hbm [shape: bf16[128,128], index: 3, kind: input, shape index: {}]
  %s4 = inlined_call_operand.hbm [shape: f32[1,128], index: 4, kind: input, shape index: {}]
  %s5 = inlined_call_operand.hbm [shape: bf16[128,128], index: 5, kind: input, shape index: {}]
  %s6 = inlined_call_operand.hbm [shape: f32[1,128], index: 6, kind: input, shape index: {}]
  %s7 = inlined_call_operand.vmem [shape: f32[300,128], index: 7, kind: output, shape index: {}]
  %s8 = sld [smem:[#allocation0]]
  $region89: #{_mlp_forward.1} parent=0
    _
  %s10 = ssub.s32 1, %s8
  %s11 = scalar_select 0, %s10, %s8
  $region1: #{_mlp_forward.1} parent=0
    #allocation2 [shape = 'u8[1089536]{0}', space=vmem, size = 0x10a000, scoped, tag = 'input window, operand 0']
    #allocation3 [shape = 's32[2]{0}', space=sflag, size = 0x8, scoped, tag = 'scoped memory for _mlp_forward.1']
    #allocation4 [shape = 'u8[200704]{0}', space=vmem, size = 0x31000, scoped, tag = 'input window, operand 1, single buffered']
    #allocation5 [shape = 's32[1]{0}', space=sflag, size = 0x4, scoped, tag = 'scoped memory for _mlp_forward.1']
    #allocation6 [shape = 'u8[512]{0}', space=vmem, size = 0x400, scoped, tag = 'input window, operand 2, single buffered']
    #allocation7 [shape = 'u8[32768]{0}', space=vmem, size = 0x8000, scoped, tag = 'input window, operand 3, single buffered']
    #allocation8 [shape = 's32[1]{0}', space=sflag, size = 0x4, scoped, tag = 'scoped memory for _mlp_forward.1']
    #allocation9 [shape = 'u8[512]{0}', space=vmem, size = 0x400, scoped, tag = 'input window, operand 4, single buffered']
    #allocation10 [shape = 'u8[32768]{0}', space=vmem, size = 0x8000, scoped, tag = 'input window, operand 5, single buffered']
    #allocation11 [shape = 's32[1]{0}', space=sflag, size = 0x4, scoped, tag = 'scoped memory for _mlp_forward.1']
    #allocation12 [shape = 'u8[512]{0}', space=vmem, size = 0x400, scoped, tag = 'input window, operand 6, single buffered']
    %12 = vsyncpa [#allocation3], 0
    %s13 = scalar_lea.sflag [#allocation3], 1
    %14 = vsyncpa %s13, 0
    %15 = vsyncpa [#allocation5], 0
    %16 = vsyncpa [#allocation8], 0
    %17 = vsyncpa [#allocation11], 0
    loop: start=0, step=1, limit=4
    $region2: #{_mlp_forward.1} parent=1 // loop_pre_header
      _
    $region3: #{_mlp_forward.1} parent=1 // loop_header
      %s19 = sphi 0, %s23
      %p20 = scmp.ge.s32.totalorder %s19, 4
      %s29 = sphi 0, %s31
      %s32 = sphi 0, %s29
      %s33 = sphi 0, %s32
      %s49 = sphi 0, %s33
      %s53 = sphi 0, %s53
      %s55 = sphi 0, %s53
      %s56 = sphi 0, %s55
      %s70 = sphi 0, %s56
      %s74 = sphi 0, %s74
      %s76 = sphi 0, %s74
      %s77 = sphi 0, %s76
      %s91 = sphi 0, %s77
      %s95 = sphi 0, %s95
      %s97 = sphi 0, %s95
      %s98 = sphi 0, %s97
      %s112 = sphi 0, %s98
      %s116 = sphi 0, %s116
      %s118 = sphi 0, %s116
      %s119 = sphi 0, %s118
      %s133 = sphi 0, %s119
      %s137 = sphi 0, %s137
      %s139 = sphi 0, %s137
      %s140 = sphi 0, %s139
      %s154 = sphi 0, %s140
      %s158 = sphi 0, %s158
      %s160 = sphi 0, %s158
      %s161 = sphi 0, %s160
      %s175 = sphi 0, %s161
      %s181 = sphi 0, %s183
      %s184 = sphi 0, %s181
      %s185 = sphi 0, %s184
      %s201 = sphi 0, %s185
    $region4: #{_mlp_forward.1} parent=1 // loop_header_branch
      %22 = sbr.rel (%p20) target = $region8
    $region5: #{_mlp_forward.1} parent=1 // loop_body
      %s24 = ssub.s32 %s19, 1
      %s25 = ssub.s32 %s19, 2
      %s26 = sadd.s32 %s19, 1
      %s27 = ssub.s32 %s19, %s26
      %p28 = scmp.eq.s32.totalorder %s27, 0
      %s30 = sadd.s32 %s29, 1
      %s31 = scalar_select %p28, %s29, %s30
      %p34 = pneg %p28
      %p35 = scmp.eq.s32.totalorder %s19, 1
      %p36 = por %p34, %p35
      %p37 = scmp.ne.s32.totalorder %s29, %s32
      %p38 = scmp.eq.s32.totalorder %s19, 0
      %p39 = por %p37, %p38
      %p40 = scmp.ne.s32.totalorder %s29, %s32
      %p41 = scmp.eq.s32.totalorder %s24, 1
      %p42 = por %p40, %p41
      %p43 = scmp.ne.s32.totalorder %s32, %s33
      %p44 = scmp.eq.s32.totalorder %s24, 0
      %p45 = por %p43, %p44
      %p46 = scmp.ne.s32.totalorder %s32, %s33
      %p47 = scmp.eq.s32.totalorder %s25, 1
      %p48 = por %p46, %p47
      %p50 = scmp.ne.s32.totalorder %s33, %s49
      %p51 = scmp.eq.s32.totalorder %s25, 0
      %p52 = por %p50, %p51
      %s54 = sadd.s32 %s53, 1
      %p57 = scmp.eq.s32.totalorder %s19, 1
      %p58 = scmp.ne.s32.totalorder %s53, %s55
      %p59 = scmp.eq.s32.totalorder %s19, 0
      %p60 = por %p58, %p59
      %p61 = scmp.ne.s32.totalorder %s53, %s55
      %p62 = scmp.eq.s32.totalorder %s24, 1
      %p63 = por %p61, %p62
      %p64 = scmp.ne.s32.totalorder %s55, %s56
      %p65 = scmp.eq.s32.totalorder %s24, 0
      %p66 = por %p64, %p65
      %p67 = scmp.ne.s32.totalorder %s55, %s56
      %p68 = scmp.eq.s32.totalorder %s25, 1
      %p69 = por %p67, %p68
      %p71 = scmp.ne.s32.totalorder %s56, %s70
      %p72 = scmp.eq.s32.totalorder %s25, 0
      %p73 = por %p71, %p72
      %s75 = sadd.s32 %s74, 1
      %p78 = scmp.eq.s32.totalorder %s19, 1
      %p79 = scmp.ne.s32.totalorder %s74, %s76
      %p80 = scmp.eq.s32.totalorder %s19, 0
      %p81 = por %p79, %p80
      %p82 = scmp.ne.s32.totalorder %s74, %s76
      %p83 = scmp.eq.s32.totalorder %s24, 1
      %p84 = por %p82, %p83
      %p85 = scmp.ne.s32.totalorder %s76, %s77
      %p86 = scmp.eq.s32.totalorder %s24, 0
      %p87 = por %p85, %p86
      %p88 = scmp.ne.s32.totalorder %s76, %s77
      %p89 = scmp.eq.s32.totalorder %s25, 1
      %p90 = por %p88, %p89
      %p92 = scmp.ne.s32.totalorder %s77, %s91
      %p93 = scmp.eq.s32.totalorder %s25, 0
      %p94 = por %p92, %p93
      %s96 = sadd.s32 %s95, 1
      %p99 = scmp.eq.s32.totalorder %s19, 1
      %p100 = scmp.ne.s32.totalorder %s95, %s97
      %p101 = scmp.eq.s32.totalorder %s19, 0
      %p102 = por %p100, %p101
      %p103 = scmp.ne.s32.totalorder %s95, %s97
      %p104 = scmp.eq.s32.totalorder %s24, 1
      %p105 = por %p103, %p104
      %p106 = scmp.ne.s32.totalorder %s97, %s98
      %p107 = scmp.eq.s32.totalorder %s24, 0
      %p108 = por %p106, %p107
      %p109 = scmp.ne.s32.totalorder %s97, %s98
      %p110 = scmp.eq.s32.totalorder %s25, 1
      %p111 = por %p109, %p110
      %p113 = scmp.ne.s32.totalorder %s98, %s112
      %p114 = scmp.eq.s32.totalorder %s25, 0
      %p115 = por %p113, %p114
      %s117 = sadd.s32 %s116, 1
      %p120 = scmp.eq.s32.totalorder %s19, 1
      %p121 = scmp.ne.s32.totalorder %s116, %s118
      %p122 = scmp.eq.s32.totalorder %s19, 0
      %p123 = por %p121, %p122
      %p124 = scmp.ne.s32.totalorder %s116, %s118
      %p125 = scmp.eq.s32.totalorder %s24, 1
      %p126 = por %p124, %p125
      %p127 = scmp.ne.s32.totalorder %s118, %s119
      %p128 = scmp.eq.s32.totalorder %s24, 0
      %p129 = por %p127, %p128
      %p130 = scmp.ne.s32.totalorder %s118, %s119
      %p131 = scmp.eq.s32.totalorder %s25, 1
      %p132 = por %p130, %p131
      %p134 = scmp.ne.s32.totalorder %s119, %s133
      %p135 = scmp.eq.s32.totalorder %s25, 0
      %p136 = por %p134, %p135
      %s138 = sadd.s32 %s137, 1
      %p141 = scmp.eq.s32.totalorder %s19, 1
      %p142 = scmp.ne.s32.totalorder %s137, %s139
      %p143 = scmp.eq.s32.totalorder %s19, 0
      %p144 = por %p142, %p143
      %p145 = scmp.ne.s32.totalorder %s137, %s139
      %p146 = scmp.eq.s32.totalorder %s24, 1
      %p147 = por %p145, %p146
      %p148 = scmp.ne.s32.totalorder %s139, %s140
      %p149 = scmp.eq.s32.totalorder %s24, 0
      %p150 = por %p148, %p149
      %p151 = scmp.ne.s32.totalorder %s139, %s140
      %p152 = scmp.eq.s32.totalorder %s25, 1
      %p153 = por %p151, %p152
      %p155 = scmp.ne.s32.totalorder %s140, %s154
      %p156 = scmp.eq.s32.totalorder %s25, 0
      %p157 = por %p155, %p156
      %s159 = sadd.s32 %s158, 1
      %p162 = scmp.eq.s32.totalorder %s19, 1
      %p163 = scmp.ne.s32.totalorder %s158, %s160
      %p164 = scmp.eq.s32.totalorder %s19, 0
      %p165 = por %p163, %p164
      %p166 = scmp.ne.s32.totalorder %s158, %s160
      %p167 = scmp.eq.s32.totalorder %s24, 1
      %p168 = por %p166, %p167
      %p169 = scmp.ne.s32.totalorder %s160, %s161
      %p170 = scmp.eq.s32.totalorder %s24, 0
      %p171 = por %p169, %p170
      %p172 = scmp.ne.s32.totalorder %s160, %s161
      %p173 = scmp.eq.s32.totalorder %s25, 1
      %p174 = por %p172, %p173
      %p176 = scmp.ne.s32.totalorder %s161, %s175
      %p177 = scmp.eq.s32.totalorder %s25, 0
      %p178 = por %p176, %p177
      %s179 = ssub.s32 %s19, %s26
      %p180 = scmp.eq.s32.totalorder %s179, 0
      %s182 = sadd.s32 %s181, 1
      %s183 = scalar_select %p180, %s181, %s182
      %p186 = pneg %p180
      %p187 = scmp.eq.s32.totalorder %s19, 1
      %p188 = por %p186, %p187
      %p189 = scmp.ne.s32.totalorder %s181, %s184
      %p190 = scmp.eq.s32.totalorder %s19, 0
      %p191 = por %p189, %p190
      %p192 = scmp.ne.s32.totalorder %s181, %s184
      %p193 = scmp.eq.s32.totalorder %s24, 1
      %p194 = por %p192, %p193
      %p195 = scmp.ne.s32.totalorder %s184, %s185
      %p196 = scmp.eq.s32.totalorder %s24, 0
      %p197 = por %p195, %p196
      %p198 = scmp.ne.s32.totalorder %s184, %s185
      %p199 = scmp.eq.s32.totalorder %s25, 1
      %p200 = por %p198, %p199
      %p202 = scmp.ne.s32.totalorder %s185, %s201
      %p203 = scmp.eq.s32.totalorder %s25, 0
      %p204 = por %p202, %p203
      %p205 = scmp.le.s32.totalorder 1, %s19
      %p206 = scmp.lt.s32.totalorder %s19, 3
      %p207 = pnand %p205, %p206
      %p208 = pneg %p207
      // Predicated region
      $region9: #{_mlp_forward.1} parent=5 // pred_check
        _
      $region10: #{_mlp_forward.1} parent=5 // pred_check_branch
        %210 = sbr.rel (%p207) target = $region12
      $region11: #{_mlp_forward.1} parent=5 // pred_region
        %s211 = ssub.s32 %s19, 1
        // Predicated region
        $region13: #{_mlp_forward.1} parent=11 // pred_check
          %p212 = pneg %p66
        $region14: #{_mlp_forward.1} parent=11 // pred_check_branch
          %214 = sbr.rel (%p212) target = $region16
        $region15: #{_mlp_forward.1} parent=11 // pred_region
          %216 = vsyncadd [#allocation5], 0
          %s217 = sshll.u32 %s1, 4
          %s218 = int_to_ptr.hbm [resolvable:$true] %s217
          %s219 = sshll.u32 [#allocation4], 4
          %s220 = int_to_ptr.vmem [resolvable:$true] %s219
          %225 = dma.hbm_to_vmem [thread:$0]  %s218, 6272, %s220, [#allocation5], 64, 64, 4
        $region16: #{_mlp_forward.1} parent=11 // pred_fallthru
          _
        // Predicated region
        $region17: #{_mlp_forward.1} parent=11 // pred_check
          %p226 = pneg %p87
        $region18: #{_mlp_forward.1} parent=11 // pred_check_branch
          %228 = sbr.rel (%p226) target = $region20
        $region19: #{_mlp_forward.1} parent=11 // pred_region
          %230 = vsyncadd [#allocation5], 0
          %s232 = sshll.u32 %s2, 4
          %s233 = int_to_ptr.hbm [resolvable:$true] %s232
          %s234 = sshll.u32 [#allocation6], 4
          %s235 = int_to_ptr.vmem [resolvable:$true] %s234
          %237 = dma.hbm_to_vmem [thread:$0]  %s233, 16, %s235, [#allocation5]
        $region20: #{_mlp_forward.1} parent=11 // pred_fallthru
          _
        // Predicated region
        $region21: #{_mlp_forward.1} parent=11 // pred_check
          %p238 = pneg %p108
        $region22: #{_mlp_forward.1} parent=11 // pred_check_branch
          %240 = sbr.rel (%p238) target = $region24
        $region23: #{_mlp_forward.1} parent=11 // pred_region
          %242 = vsyncadd [#allocation8], 0
          %s243 = sshll.u32 %s3, 4
          %s244 = int_to_ptr.hbm [resolvable:$true] %s243
          %s245 = sshll.u32 [#allocation7], 4
          %s246 = int_to_ptr.vmem [resolvable:$true] %s245
          %251 = dma.hbm_to_vmem [thread:$0]  %s244, 1024, %s246, [#allocation8], 64, 64, 4
        $region24: #{_mlp_forward.1} parent=11 // pred_fallthru
          _
        // Predicated region
        $region25: #{_mlp_forward.1} parent=11 // pred_check
          %p252 = pneg %p129
        $region26: #{_mlp_forward.1} parent=11 // pred_check_branch
          %254 = sbr.rel (%p252) target = $region28
        $region27: #{_mlp_forward.1} parent=11 // pred_region
          %256 = vsyncadd [#allocation8], 0
          %s258 = sshll.u32 %s4, 4
          %s259 = int_to_ptr.hbm [resolvable:$true] %s258
          %s260 = sshll.u32 [#allocation9], 4
          %s261 = int_to_ptr.vmem [resolvable:$true] %s260
          %263 = dma.hbm_to_vmem [thread:$0]  %s259, 16, %s261, [#allocation8]
        $region28: #{_mlp_forward.1} parent=11 // pred_fallthru
          _
        // Predicated region
        $region29: #{_mlp_forward.1} parent=11 // pred_check
          %p264 = pneg %p150
        $region30: #{_mlp_forward.1} parent=11 // pred_check_branch
          %266 = sbr.rel (%p264) target = $region32
        $region31: #{_mlp_forward.1} parent=11 // pred_region
          %268 = vsyncadd [#allocation11], 0
          %s269 = sshll.u32 %s5, 4
          %s270 = int_to_ptr.hbm [resolvable:$true] %s269
          %s271 = sshll.u32 [#allocation10], 4
          %s272 = int_to_ptr.vmem [resolvable:$true] %s271
          %277 = dma.hbm_to_vmem [thread:$0]  %s270, 1024, %s272, [#allocation11], 64, 64, 4
        $region32: #{_mlp_forward.1} parent=11 // pred_fallthru
          _
        // Predicated region
        $region33: #{_mlp_forward.1} parent=11 // pred_check
          %p278 = pneg %p171
        $region34: #{_mlp_forward.1} parent=11 // pred_check_branch
          %280 = sbr.rel (%p278) target = $region36
        $region35: #{_mlp_forward.1} parent=11 // pred_region
          %282 = vsyncadd [#allocation11], 0
          %s284 = sshll.u32 %s6, 4
          %s285 = int_to_ptr.hbm [resolvable:$true] %s284
          %s286 = sshll.u32 [#allocation12], 4
          %s287 = int_to_ptr.vmem [resolvable:$true] %s286
          %289 = dma.hbm_to_vmem [thread:$0]  %s285, 16, %s287, [#allocation11]
        $region36: #{_mlp_forward.1} parent=11 // pred_fallthru
          _
      $region12: #{_mlp_forward.1} parent=5 // pred_fallthru
        _
      %p290 = scmp.lt.s32.totalorder %s19, 2
      // Predicated region
      $region37: #{_mlp_forward.1} parent=5 // pred_check
        %p291 = pneg %p290
      $region38: #{_mlp_forward.1} parent=5 // pred_check_branch
        %293 = sbr.rel (%p291) target = $region40
      $region39: #{_mlp_forward.1} parent=5 // pred_region
        // Predicated region
        $region41: #{_mlp_forward.1} parent=39 // pred_check
          %p294 = pneg %p39
        $region42: #{_mlp_forward.1} parent=39 // pred_check_branch
          %296 = sbr.rel (%p294) target = $region44
        $region43: #{_mlp_forward.1} parent=39 // pred_region
          %s297 = sand.u32 %s29, 1
          %s298 = scalar_lea.sflag [#allocation3], %s297
          %s299 = sand.u32 %s29, 1
          %s300 = smul.addr %s299, 1064
          %s301 = scalar_lea.vmem [#allocation2], %s300
          %s302 = smul.u32 19, %s19
          %304 = vsyncadd %s298, 0
          %s305 = smul.addr %s302, 7
          %s306 = smul.addr %s305, 8
          %s307 = scalar_lea.hbm %s0, %s306
          %s308 = sshll.u32 %s307, 4
          %s309 = int_to_ptr.hbm [resolvable:$true] %s308
          %s310 = sshll.u32 %s301, 4
          %s311 = int_to_ptr.vmem [resolvable:$true] %s310
          %316 = dma.hbm_to_vmem [thread:$0]  %s309, 17024, %s311, %s298, 896, 896, 56
        $region44: #{_mlp_forward.1} parent=39 // pred_fallthru
          _
      $region40: #{_mlp_forward.1} parent=5 // pred_fallthru
        _
      %p317 = scmp.le.s32.totalorder 1, %s19
      %p318 = scmp.lt.s32.totalorder %s19, 3
      %p319 = pnand %p317, %p318
      %p320 = pneg %p319
      // Predicated region
      $region45: #{_mlp_forward.1} parent=5 // pred_check
        _
      $region46: #{_mlp_forward.1} parent=5 // pred_check_branch
        %322 = sbr.rel (%p319) target = $region48
      $region47: #{_mlp_forward.1} parent=5 // pred_region
        %s323 = ssub.s32 %s19, 1
        %s324 = sand.u32 %s32, 1
        %s325 = scalar_lea.sflag [#allocation3], %s324
        %s326 = sand.u32 %s32, 1
        %s327 = smul.addr %s326, 1064
        %s328 = scalar_lea.vmem [#allocation2], %s327
        // Predicated region
        $region49: #{_mlp_forward.1} parent=47 // pred_check
          %p329 = pneg %p45
        $region50: #{_mlp_forward.1} parent=47 // pred_check_branch
          %331 = sbr.rel (%p329) target = $region52
        $region51: #{_mlp_forward.1} parent=47 // pred_region
          %333 = dma.done %s325, 17024
        $region52: #{_mlp_forward.1} parent=47 // pred_fallthru
          _
        // Predicated region
        $region53: #{_mlp_forward.1} parent=47 // pred_check
          %p334 = pneg %p66
        $region54: #{_mlp_forward.1} parent=47 // pred_check_branch
          %336 = sbr.rel (%p334) target = $region56
        $region55: #{_mlp_forward.1} parent=47 // pred_region
          %338 = dma.done [#allocation5], 6272
        $region56: #{_mlp_forward.1} parent=47 // pred_fallthru
          _
        // Predicated region
        $region57: #{_mlp_forward.1} parent=47 // pred_check
          %p339 = pneg %p87
        $region58: #{_mlp_forward.1} parent=47 // pred_check_branch
          %341 = sbr.rel (%p339) target = $region60
        $region59: #{_mlp_forward.1} parent=47 // pred_region
          %343 = dma.done [#allocation5], 16
        $region60: #{_mlp_forward.1} parent=47 // pred_fallthru
          _
        // Predicated region
        $region61: #{_mlp_forward.1} parent=47 // pred_check
          %p344 = pneg %p108
        $region62: #{_mlp_forward.1} parent=47 // pred_check_branch
          %346 = sbr.rel (%p344) target = $region64
        $region63: #{_mlp_forward.1} parent=47 // pred_region
          %348 = dma.done [#allocation8], 1024
        $region64: #{_mlp_forward.1} parent=47 // pred_fallthru
          _
        // Predicated region
        $region65: #{_mlp_forward.1} parent=47 // pred_check
          %p349 = pneg %p129
        $region66: #{_mlp_forward.1} parent=47 // pred_check_branch
          %351 = sbr.rel (%p349) target = $region68
        $region67: #{_mlp_forward.1} parent=47 // pred_region
          %353 = dma.done [#allocation8], 16
        $region68: #{_mlp_forward.1} parent=47 // pred_fallthru
          _
        // Predicated region
        $region69: #{_mlp_forward.1} parent=47 // pred_check
          %p354 = pneg %p150
        $region70: #{_mlp_forward.1} parent=47 // pred_check_branch
          %356 = sbr.rel (%p354) target = $region72
        $region71: #{_mlp_forward.1} parent=47 // pred_region
          %358 = dma.done [#allocation11], 1024
        $region72: #{_mlp_forward.1} parent=47 // pred_fallthru
          _
        // Predicated region
        $region73: #{_mlp_forward.1} parent=47 // pred_check
          %p359 = pneg %p171
        $region74: #{_mlp_forward.1} parent=47 // pred_check_branch
          %361 = sbr.rel (%p359) target = $region76
        $region75: #{_mlp_forward.1} parent=47 // pred_region
          %363 = dma.done [#allocation11], 16
        $region76: #{_mlp_forward.1} parent=47 // pred_fallthru
          _
        %s364 = sand.u32 %s32, 1
        %s365 = scalar_lea.sflag [#allocation3], %s364
        %s366 = sand.u32 %s32, 1
        %s367 = smul.addr %s366, 1064
        %s368 = scalar_lea.vmem [#allocation2], %s367
        %p369 = pneg %p45
        %p370 = pneg %p42
        %p371 = pneg %p66
        %p372 = pneg %p63
        %p373 = pneg %p87
        %p374 = pneg %p84
        %p375 = pneg %p108
        %p376 = pneg %p105
        %p377 = pneg %p129
        %p378 = pneg %p126
        %p379 = pneg %p150
        %p380 = pneg %p147
        %p381 = pneg %p171
        %p382 = pneg %p168
        %p383 = pneg %p197
        %p384 = pneg %p194
        %s385 = smul.u32 19, %s24
        %p386 = scmp.lt.s32.totalorder %s385, 37
        %s387 = scalar_select %p386, %s385, 37
        %s388 = smul.addr %s387, 8
        %s389 = scalar_lea.vmem %s7, %s388
        %s390 = smul.u32 19, %s24
        %s391 = smul.u32 19, %s24
        %p392 = scmp.lt.s32.totalorder %s391, 37
        %s393 = scalar_select %p392, %s391, 37
        %s394 = smul.addr %s393, 8
        %s395 = scalar_lea.vmem %s7, %s394
        %s396 = smul.u32 19, %s24
        %v398 = vld [vmem:[%s328] sm:$0xff]
        %v399 = vld [vmem:[%s328 + $0x8] sm:$0xff]
        %v400 = vld [vmem:[%s328 + $0x10] sm:$0xff]
        %v401 = vld [vmem:[%s328 + $0x18] sm:$0xff]
        %v402 = vld [vmem:[%s328 + $0x20] sm:$0xff]
        %v403 = vld [vmem:[%s328 + $0x28] sm:$0xff]
        %v404 = vld [vmem:[%s328 + $0x30] sm:$0xff]
        %v405 = vld [vmem:[%s328 + $0x38] sm:$0xff]
        %v406 = vld [vmem:[%s328 + $0x40] sm:$0xff]
        %v407 = vld [vmem:[%s328 + $0x48] sm:$0xff]
        %v408 = vld [vmem:[%s328 + $0x50] sm:$0xff]
        %v409 = vld [vmem:[%s328 + $0x58] sm:$0xff]
        %v410 = vld [vmem:[%s328 + $0x60] sm:$0xff]
        %v411 = vld [vmem:[%s328 + $0x68] sm:$0xff]
        %v412 = vld [vmem:[%s328 + $0x70] sm:$0xff]
        %v413 = vld [vmem:[%s328 + $0x78] sm:$0xff]
        %v414 = vld [vmem:[%s328 + $0x80] sm:$0xff]
        %v415 = vld [vmem:[%s328 + $0x88] sm:$0xff]
        %v416 = vld [vmem:[%s328 + $0x90] sm:$0xff]
        %v417 = vld [vmem:[%s328 + $0x98] sm:$0xff]
        %v418 = vld [vmem:[%s328 + $0xa0] sm:$0xff]
        %v419 = vld [vmem:[%s328 + $0xa8] sm:$0xff]
        %v420 = vld [vmem:[%s328 + $0xb0] sm:$0xff]
        %v421 = vld [vmem:[%s328 + $0xb8] sm:$0xff]
        %v422 = vld [vmem:[%s328 + $0xc0] sm:$0xff]
        %v423 = vld [vmem:[%s328 + $0xc8] sm:$0xff]
        %v424 = vld [vmem:[%s328 + $0xd0] sm:$0xff]
        %v425 = vld [vmem:[%s328 + $0xd8] sm:$0xff]
        %v426 = vld [vmem:[%s328 + $0xe0] sm:$0xff]
        %v427 = vld [vmem:[%s328 + $0xe8] sm:$0xff]
        %v428 = vld [vmem:[%s328 + $0xf0] sm:$0xff]
        %v429 = vld [vmem:[%s328 + $0xf8] sm:$0xff]
        %v430 = vld [vmem:[%s328 + $0x100] sm:$0xff]
        %v431 = vld [vmem:[%s328 + $0x108] sm:$0xff]
        %v432 = vld [vmem:[%s328 + $0x110] sm:$0xff]
        %v433 = vld [vmem:[%s328 + $0x118] sm:$0xff]
        %v434 = vld [vmem:[%s328 + $0x120] sm:$0xff]
        %v435 = vld [vmem:[%s328 + $0x128] sm:$0xff]
        %v436 = vld [vmem:[%s328 + $0x130] sm:$0xff]
        %v437 = vld [vmem:[%s328 + $0x138] sm:$0xff]
        %v438 = vld [vmem:[%s328 + $0x140] sm:$0xff]
        %v439 = vld [vmem:[%s328 + $0x148] sm:$0xff]
        %v440 = vld [vmem:[%s328 + $0x150] sm:$0xff]
        %v441 = vld [vmem:[%s328 + $0x158] sm:$0xff]
        %v442 = vld [vmem:[%s328 + $0x160] sm:$0xff]
        %v443 = vld [vmem:[%s328 + $0x168] sm:$0xff]
        %v444 = vld [vmem:[%s328 + $0x170] sm:$0xff]
        %v445 = vld [vmem:[%s328 + $0x178] sm:$0xff]
        %v446 = vld [vmem:[%s328 + $0x180] sm:$0xff]
        %v447 = vld [vmem:[%s328 + $0x188] sm:$0xff]
        %v448 = vld [vmem:[%s328 + $0x190] sm:$0xff]
        %v449 = vld [vmem:[%s328 + $0x198] sm:$0xff]
        %v450 = vld [vmem:[%s328 + $0x1a0] sm:$0xff]
        %v451 = vld [vmem:[%s328 + $0x1a8] sm:$0xff]
        %v452 = vld [vmem:[%s328 + $0x1b0] sm:$0xff]
        %v453 = vld [vmem:[%s328 + $0x1b8] sm:$0xff]
        %v454 = vld [vmem:[%s328 + $0x1c0] sm:$0xff]
        %v455 = vld [vmem:[%s328 + $0x1c8] sm:$0xff]
        %v456 = vld [vmem:[%s328 + $0x1d0] sm:$0xff]
        %v457 = vld [vmem:[%s328 + $0x1d8] sm:$0xff]
        %v458 = vld [vmem:[%s328 + $0x1e0] sm:$0xff]
        %v459 = vld [vmem:[%s328 + $0x1e8] sm:$0xff]
        %v460 = vld [vmem:[%s328 + $0x1f0] sm:$0xff]
        %v461 = vld [vmem:[%s328 + $0x1f8] sm:$0xff]
        %v462 = vld [vmem:[%s328 + $0x200] sm:$0xff]
        %v463 = vld [vmem:[%s328 + $0x208] sm:$0xff]
        %v464 = vld [vmem:[%s328 + $0x210] sm:$0xff]
        %v465 = vld [vmem:[%s328 + $0x218] sm:$0xff]
        %v466 = vld [vmem:[%s328 + $0x220] sm:$0xff]
        %v467 = vld [vmem:[%s328 + $0x228] sm:$0xff]
        %v468 = vld [vmem:[%s328 + $0x230] sm:$0xff]
        %v469 = vld [vmem:[%s328 + $0x238] sm:$0xff]
        %v470 = vld [vmem:[%s328 + $0x240] sm:$0xff]
        %v471 = vld [vmem:[%s328 + $0x248] sm:$0xff]
        %v472 = vld [vmem:[%s328 + $0x250] sm:$0xff]
        %v473 = vld [vmem:[%s328 + $0x258] sm:$0xff]
        %v474 = vld [vmem:[%s328 + $0x260] sm:$0xff]
        %v475 = vld [vmem:[%s328 + $0x268] sm:$0xff]
        %v476 = vld [vmem:[%s328 + $0x270] sm:$0xff]
        %v477 = vld [vmem:[%s328 + $0x278] sm:$0xff]
        %v478 = vld [vmem:[%s328 + $0x280] sm:$0xff]
        %v479 = vld [vmem:[%s328 + $0x288] sm:$0xff]
        %v480 = vld [vmem:[%s328 + $0x290] sm:$0xff]
        %v481 = vld [vmem:[%s328 + $0x298] sm:$0xff]
        %v482 = vld [vmem:[%s328 + $0x2a0] sm:$0xff]
        %v483 = vld [vmem:[%s328 + $0x2a8] sm:$0xff]
        %v484 = vld [vmem:[%s328 + $0x2b0] sm:$0xff]
        %v485 = vld [vmem:[%s328 + $0x2b8] sm:$0xff]
        %v486 = vld [vmem:[%s328 + $0x2c0] sm:$0xff]
        %v487 = vld [vmem:[%s328 + $0x2c8] sm:$0xff]
        %v488 = vld [vmem:[%s328 + $0x2d0] sm:$0xff]
        %v489 = vld [vmem:[%s328 + $0x2d8] sm:$0xff]
        %v490 = vld [vmem:[%s328 + $0x2e0] sm:$0xff]
        %v491 = vld [vmem:[%s328 + $0x2e8] sm:$0xff]
        %v492 = vld [vmem:[%s328 + $0x2f0] sm:$0xff]
        %v493 = vld [vmem:[%s328 + $0x2f8] sm:$0xff]
        %v494 = vld [vmem:[%s328 + $0x300] sm:$0xff]
        %v495 = vld [vmem:[%s328 + $0x308] sm:$0xff]
        %v496 = vld [vmem:[%s328 + $0x310] sm:$0xff]
        %v497 = vld [vmem:[%s328 + $0x318] sm:$0xff]
        %v498 = vld [vmem:[%s328 + $0x320] sm:$0xff]
        %v499 = vld [vmem:[%s328 + $0x328] sm:$0xff]
        %v500 = vld [vmem:[%s328 + $0x330] sm:$0xff]
        %v501 = vld [vmem:[%s328 + $0x338] sm:$0xff]
        %v502 = vld [vmem:[%s328 + $0x340] sm:$0xff]
        %v503 = vld [vmem:[%s328 + $0x348] sm:$0xff]
        %v504 = vld [vmem:[%s328 + $0x350] sm:$0xff]
        %v505 = vld [vmem:[%s328 + $0x358] sm:$0xff]
        %v506 = vld [vmem:[%s328 + $0x360] sm:$0xff]
        %v507 = vld [vmem:[%s328 + $0x368] sm:$0xff]
        %v508 = vld [vmem:[%s328 + $0x370] sm:$0xff]
        %v509 = vld [vmem:[%s328 + $0x378] sm:$0xff]
        %v510 = vld [vmem:[%s328 + $0x380] sm:$0xff]
        %v511 = vld [vmem:[%s328 + $0x388] sm:$0xff]
        %v512 = vld [vmem:[%s328 + $0x390] sm:$0xff]
        %v513 = vld [vmem:[%s328 + $0x398] sm:$0xff]
        %v514 = vld [vmem:[%s328 + $0x3a0] sm:$0xff]
        %v515 = vld [vmem:[%s328 + $0x3a8] sm:$0xff]
        %v516 = vld [vmem:[%s328 + $0x3b0] sm:$0xff]
        %v517 = vld [vmem:[%s328 + $0x3b8] sm:$0xff]
        %v518 = vld [vmem:[%s328 + $0x3c0] sm:$0xff]
        %v519 = vld [vmem:[%s328 + $0x3c8] sm:$0xff]
        %v520 = vld [vmem:[%s328 + $0x3d0] sm:$0xff]
        %v521 = vld [vmem:[%s328 + $0x3d8] sm:$0xff]
        %v522 = vld [vmem:[%s328 + $0x3e0] sm:$0xff]
        %v523 = vld [vmem:[%s328 + $0x3e8] sm:$0xff]
        %v524 = vld [vmem:[%s328 + $0x3f0] sm:$0xff]
        %v525 = vld [vmem:[%s328 + $0x3f8] sm:$0xff]
        %v526 = vld [vmem:[%s328 + $0x400] sm:$0xff]
        %v527 = vld [vmem:[%s328 + $0x408] sm:$0xff]
        %v528 = vld [vmem:[%s328 + $0x410] sm:$0xff]
        %v529 = vld [vmem:[%s328 + $0x418] sm:$0xff]
        %v530 = vld [vmem:[%s328 + $0x420] sm:$0xff]
        %v531 = vpack.c.bf16 %v405, %v398
        %v532 = vpack.c.bf16 %v406, %v399
        %v533 = vpack.c.bf16 %v407, %v400
        %v534 = vpack.c.bf16 %v408, %v401
        %v535 = vpack.c.bf16 %v409, %v402
        %v536 = vpack.c.bf16 %v410, %v403
        %v537 = vpack.c.bf16 %v411, %v404
        %v538 = vpack.c.bf16 %v419, %v412
        %v539 = vpack.c.bf16 %v420, %v413
        %v540 = vpack.c.bf16 %v421, %v414
        %v541 = vpack.c.bf16 %v422, %v415
        %v542 = vpack.c.bf16 %v423, %v416
        %v543 = vpack.c.bf16 %v424, %v417
        %v544 = vpack.c.bf16 %v425, %v418
        %v545 = vpack.c.bf16 %v433, %v426
        %v546 = vpack.c.bf16 %v434, %v427
        %v547 = vpack.c.bf16 %v435, %v428
        %v548 = vpack.c.bf16 %v436, %v429
        %v549 = vpack.c.bf16 %v437, %v430
        %v550 = vpack.c.bf16 %v438, %v431
        %v551 = vpack.c.bf16 %v439, %v432
        %v552 = vpack.c.bf16 %v447, %v440
        %v553 = vpack.c.bf16 %v448, %v441
        %v554 = vpack.c.bf16 %v449, %v442
        %v555 = vpack.c.bf16 %v450, %v443
        %v556 = vpack.c.bf16 %v451, %v444
        %v557 = vpack.c.bf16 %v452, %v445
        %v558 = vpack.c.bf16 %v453, %v446
        %v559 = vpack.c.bf16 %v461, %v454
        %v560 = vpack.c.bf16 %v462, %v455
        %v561 = vpack.c.bf16 %v463, %v456
        %v562 = vpack.c.bf16 %v464, %v457
        %v563 = vpack.c.bf16 %v465, %v458
        %v564 = vpack.c.bf16 %v466, %v459
        %v565 = vpack.c.bf16 %v467, %v460
        %v566 = vpack.c.bf16 %v475, %v468
        %v567 = vpack.c.bf16 %v476, %v469
        %v568 = vpack.c.bf16 %v477, %v470
        %v569 = vpack.c.bf16 %v478, %v471
        %v570 = vpack.c.bf16 %v479, %v472
        %v571 = vpack.c.bf16 %v480, %v473
        %v572 = vpack.c.bf16 %v481, %v474
        %v573 = vpack.c.bf16 %v489, %v482
        %v574 = vpack.c.bf16 %v490, %v483
        %v575 = vpack.c.bf16 %v491, %v484
        %v576 = vpack.c.bf16 %v492, %v485
        %v577 = vpack.c.bf16 %v493, %v486
        %v578 = vpack.c.bf16 %v494, %v487
        %v579 = vpack.c.bf16 %v495, %v488
        %v580 = vpack.c.bf16 %v503, %v496
        %v581 = vpack.c.bf16 %v504, %v497
        %v582 = vpack.c.bf16 %v505, %v498
        %v583 = vpack.c.bf16 %v506, %v499
        %v584 = vpack.c.bf16 %v507, %v500
        %v585 = vpack.c.bf16 %v508, %v501
        %v586 = vpack.c.bf16 %v509, %v502
        %v587 = vpack.c.bf16 %v517, %v510
        %v588 = vpack.c.bf16 %v518, %v511
        %v589 = vpack.c.bf16 %v519, %v512
        %v590 = vpack.c.bf16 %v520, %v513
        %v591 = vpack.c.bf16 %v521, %v514
        %v592 = vpack.c.bf16 %v522, %v515
        %v593 = vpack.c.bf16 %v523, %v516
        %v594 = vpack.c.bf16 %v524, %v524
        %v595 = vpack.c.bf16 %v525, %v525
        %v596 = vpack.c.bf16 %v526, %v526
        %v597 = vpack.c.bf16 %v527, %v527
        %v598 = vpack.c.bf16 %v528, %v528
        %v599 = vpack.c.bf16 %v529, %v529
        %v600 = vpack.c.bf16 %v530, %v530
        %v601 = vld [vmem:[#allocation4] sm:$0xf]
        %v602 = vld [vmem:[#allocation4 + $0x4] sm:$0xf]
        %v603 = vld [vmem:[#allocation4 + $0x8] sm:$0xf]
        %v604 = vld [vmem:[#allocation4 + $0xc] sm:$0xf]
        %v605 = vld [vmem:[#allocation4 + $0x10] sm:$0xf]
        %v606 = vld [vmem:[#allocation4 + $0x14] sm:$0xf]
        %v607 = vld [vmem:[#allocation4 + $0x18] sm:$0xf]
        %v608 = vld [vmem:[#allocation4 + $0x1c] sm:$0xf]
        %v609 = vld [vmem:[#allocation4 + $0x20] sm:$0xf]
        %v610 = vld [vmem:[#allocation4 + $0x24] sm:$0xf]
        %v611 = vld [vmem:[#allocation4 + $0x28] sm:$0xf]
        %v612 = vld [vmem:[#allocation4 + $0x2c] sm:$0xf]
        %v613 = vld [vmem:[#allocation4 + $0x30] sm:$0xf]
        %v614 = vld [vmem:[#allocation4 + $0x34] sm:$0xf]
        %v615 = vld [vmem:[#allocation4 + $0x38] sm:$0xf]
        %v616 = vld [vmem:[#allocation4 + $0x3c] sm:$0xf]
        %v617 = vld [vmem:[#allocation4 + $0x40] sm:$0xf]
        %v618 = vld [vmem:[#allocation4 + $0x44] sm:$0xf]
        %v619 = vld [vmem:[#allocation4 + $0x48] sm:$0xf]
        %v620 = vld [vmem:[#allocation4 + $0x4c] sm:$0xf]
        %v621 = vld [vmem:[#allocation4 + $0x50] sm:$0xf]
        %v622 = vld [vmem:[#allocation4 + $0x54] sm:$0xf]
        %v623 = vld [vmem:[#allocation4 + $0x58] sm:$0xf]
        %v624 = vld [vmem:[#allocation4 + $0x5c] sm:$0xf]
        %v625 = vld [vmem:[#allocation4 + $0x60] sm:$0xf]
        %v626 = vld [vmem:[#allocation4 + $0x64] sm:$0xf]
        %v627 = vld [vmem:[#allocation4 + $0x68] sm:$0xf]
        %v628 = vld [vmem:[#allocation4 + $0x6c] sm:$0xf]
        %v629 = vld [vmem:[#allocation4 + $0x70] sm:$0xf]
        %v630 = vld [vmem:[#allocation4 + $0x74] sm:$0xf]
        %v631 = vld [vmem:[#allocation4 + $0x78] sm:$0xf]
        %v632 = vld [vmem:[#allocation4 + $0x7c] sm:$0xf]
        %v633 = vld [vmem:[#allocation4 + $0x80] sm:$0xf]
        %v634 = vld [vmem:[#allocation4 + $0x84] sm:$0xf]
        %v635 = vld [vmem:[#allocation4 + $0x88] sm:$0xf]
        %v636 = vld [vmem:[#allocation4 + $0x8c] sm:$0xf]
        %v637 = vld [vmem:[#allocation4 + $0x90] sm:$0xf]
        %v638 = vld [vmem:[#allocation4 + $0x94] sm:$0xf]
        %v639 = vld [vmem:[#allocation4 + $0x98] sm:$0xf]
        %v640 = vld [vmem:[#allocation4 + $0x9c] sm:$0xf]
        %v641 = vld [vmem:[#allocation4 + $0xa0] sm:$0xf]
        %v642 = vld [vmem:[#allocation4 + $0xa4] sm:$0xf]
        %v643 = vld [vmem:[#allocation4 + $0xa8] sm:$0xf]
        %v644 = vld [vmem:[#allocation4 + $0xac] sm:$0xf]
        %v645 = vld [vmem:[#allocation4 + $0xb0] sm:$0xf]
        %v646 = vld [vmem:[#allocation4 + $0xb4] sm:$0xf]
        %v647 = vld [vmem:[#allocation4 + $0xb8] sm:$0xf]
        %v648 = vld [vmem:[#allocation4 + $0xbc] sm:$0xf]
        %v649 = vld [vmem:[#allocation4 + $0xc0] sm:$0xf]
        %v650 = vld [vmem:[#allocation4 + $0xc4] sm:$0xf]
        %v651 = vld [vmem:[#allocation4 + $0xc8] sm:$0xf]
        %v652 = vld [vmem:[#allocation4 + $0xcc] sm:$0xf]
        %v653 = vld [vmem:[#allocation4 + $0xd0] sm:$0xf]
        %v654 = vld [vmem:[#allocation4 + $0xd4] sm:$0xf]
        %v655 = vld [vmem:[#allocation4 + $0xd8] sm:$0xf]
        %v656 = vld [vmem:[#allocation4 + $0xdc] sm:$0xf]
        %v657 = vld [vmem:[#allocation4 + $0xe0] sm:$0xf]
        %v658 = vld [vmem:[#allocation4 + $0xe4] sm:$0xf]
        %v659 = vld [vmem:[#allocation4 + $0xe8] sm:$0xf]
        %v660 = vld [vmem:[#allocation4 + $0xec] sm:$0xf]
        %v661 = vld [vmem:[#allocation4 + $0xf0] sm:$0xf]
        %v662 = vld [vmem:[#allocation4 + $0xf4] sm:$0xf]
        %v663 = vld [vmem:[#allocation4 + $0xf8] sm:$0xf]
        %v664 = vld [vmem:[#allocation4 + $0xfc] sm:$0xf]
        %v665 = vld [vmem:[#allocation4 + $0x100] sm:$0xf]
        %v666 = vld [vmem:[#allocation4 + $0x104] sm:$0xf]
        %v667 = vld [vmem:[#allocation4 + $0x108] sm:$0xf]
        %v668 = vld [vmem:[#allocation4 + $0x10c] sm:$0xf]
        %v669 = vld [vmem:[#allocation4 + $0x110] sm:$0xf]
        %v670 = vld [vmem:[#allocation4 + $0x114] sm:$0xf]
        %v671 = vld [vmem:[#allocation4 + $0x118] sm:$0xf]
        %v672 = vld [vmem:[#allocation4 + $0x11c] sm:$0xf]
        %v673 = vld [vmem:[#allocation4 + $0x120] sm:$0xf]
        %v674 = vld [vmem:[#allocation4 + $0x124] sm:$0xf]
        %v675 = vld [vmem:[#allocation4 + $0x128] sm:$0xf]
        %v676 = vld [vmem:[#allocation4 + $0x12c] sm:$0xf]
        %v677 = vld [vmem:[#allocation4 + $0x130] sm:$0xf]
        %v678 = vld [vmem:[#allocation4 + $0x134] sm:$0xf]
        %v679 = vld [vmem:[#allocation4 + $0x138] sm:$0xf]
        %v680 = vld [vmem:[#allocation4 + $0x13c] sm:$0xf]
        %v681 = vld [vmem:[#allocation4 + $0x140] sm:$0xf]
        %v682 = vld [vmem:[#allocation4 + $0x144] sm:$0xf]
        %v683 = vld [vmem:[#allocation4 + $0x148] sm:$0xf]
        %v684 = vld [vmem:[#allocation4 + $0x14c] sm:$0xf]
        %v685 = vld [vmem:[#allocation4 + $0x150] sm:$0xf]
        %v686 = vld [vmem:[#allocation4 + $0x154] sm:$0xf]
        %v687 = vld [vmem:[#allocation4 + $0x158] sm:$0xf]
        %v688 = vld [vmem:[#allocation4 + $0x15c] sm:$0xf]
        %v689 = vld [vmem:[#allocation4 + $0x160] sm:$0xf]
        %v690 = vld [vmem:[#allocation4 + $0x164] sm:$0xf]
        %v691 = vld [vmem:[#allocation4 + $0x168] sm:$0xf]
        %v692 = vld [vmem:[#allocation4 + $0x16c] sm:$0xf]
        %v693 = vld [vmem:[#allocation4 + $0x170] sm:$0xf]
        %v694 = vld [vmem:[#allocation4 + $0x174] sm:$0xf]
        %v695 = vld [vmem:[#allocation4 + $0x178] sm:$0xf]
        %v696 = vld [vmem:[#allocation4 + $0x17c] sm:$0xf]
        %v697 = vld [vmem:[#allocation4 + $0x180] sm:$0xf]
        %v698 = vld [vmem:[#allocation4 + $0x184] sm:$0xf]
        %v699 = vld [vmem:[#allocation6] sm:$0x1]
        %v701 = vperm.slane %v699, 0
        %v801 = vunpack.c.l.b16 %v601
        %v802 = vunpack.c.l.b16 %v602
        %v803 = vunpack.c.l.b16 %v603
        %v804 = vunpack.c.l.b16 %v604
        %v805 = vunpack.c.l.b16 %v605
        %v806 = vunpack.c.l.b16 %v606
        %v807 = vunpack.c.l.b16 %v607
        %v808 = vunpack.c.l.b16 %v608
        %v809 = vunpack.c.l.b16 %v609
        %v810 = vunpack.c.l.b16 %v610
        %v811 = vunpack.c.l.b16 %v611
        %v812 = vunpack.c.l.b16 %v612
        %v813 = vunpack.c.l.b16 %v613
        %v814 = vunpack.c.l.b16 %v614
        %v815 = vunpack.c.l.b16 %v615
        %v816 = vunpack.c.l.b16 %v616
        %v817 = vunpack.c.l.b16 %v617
        %v818 = vunpack.c.l.b16 %v618
        %v819 = vunpack.c.l.b16 %v619
        %v820 = vunpack.c.l.b16 %v620
        %v821 = vunpack.c.l.b16 %v621
        %v822 = vunpack.c.l.b16 %v622
        %v823 = vunpack.c.l.b16 %v623
        %v824 = vunpack.c.l.b16 %v624
        %v825 = vunpack.c.l.b16 %v625
        %v826 = vunpack.c.l.b16 %v626
        %v827 = vunpack.c.l.b16 %v627
        %v828 = vunpack.c.l.b16 %v628
        %v829 = vunpack.c.l.b16 %v629
        %v830 = vunpack.c.l.b16 %v630
        %v831 = vunpack.c.l.b16 %v631
        %v832 = vunpack.c.l.b16 %v632
        %v833 = vunpack.c.l.b16 %v633
        %v834 = vunpack.c.l.b16 %v634
        %v835 = vunpack.c.l.b16 %v635
        %v836 = vunpack.c.l.b16 %v636
        %v837 = vunpack.c.l.b16 %v637
        %v838 = vunpack.c.l.b16 %v638
        %v839 = vunpack.c.l.b16 %v639
        %v840 = vunpack.c.l.b16 %v640
        %v841 = vunpack.c.l.b16 %v641
        %v842 = vunpack.c.l.b16 %v642
        %v843 = vunpack.c.l.b16 %v643
        %v844 = vunpack.c.l.b16 %v644
        %v845 = vunpack.c.l.b16 %v645
        %v846 = vunpack.c.l.b16 %v646
        %v847 = vunpack.c.l.b16 %v647
        %v848 = vunpack.c.l.b16 %v648
        %v849 = vunpack.c.l.b16 %v649
        %v850 = vunpack.c.l.b16 %v650
        %v851 = vunpack.c.l.b16 %v651
        %v852 = vunpack.c.l.b16 %v652
        %v853 = vunpack.c.l.b16 %v653
        %v854 = vunpack.c.l.b16 %v654
        %v855 = vunpack.c.l.b16 %v655
        %v856 = vunpack.c.l.b16 %v656
        %v857 = vunpack.c.l.b16 %v657
        %v858 = vunpack.c.l.b16 %v658
        %v859 = vunpack.c.l.b16 %v659
        %v860 = vunpack.c.l.b16 %v660
        %v861 = vunpack.c.l.b16 %v661
        %v862 = vunpack.c.l.b16 %v662
        %v863 = vunpack.c.l.b16 %v663
        %v864 = vunpack.c.l.b16 %v664
        %v865 = vunpack.c.l.b16 %v665
        %v866 = vunpack.c.l.b16 %v666
        %v867 = vunpack.c.l.b16 %v667
        %v868 = vunpack.c.l.b16 %v668
        %v869 = vunpack.c.l.b16 %v669
        %v870 = vunpack.c.l.b16 %v670
        %v871 = vunpack.c.l.b16 %v671
        %v872 = vunpack.c.l.b16 %v672
        %v873 = vunpack.c.l.b16 %v673
        %v874 = vunpack.c.l.b16 %v674
        %v875 = vunpack.c.l.b16 %v675
        %v876 = vunpack.c.l.b16 %v676
        %v877 = vunpack.c.l.b16 %v677
        %v878 = vunpack.c.l.b16 %v678
        %v879 = vunpack.c.l.b16 %v679
        %v880 = vunpack.c.l.b16 %v680
        %v881 = vunpack.c.l.b16 %v681
        %v882 = vunpack.c.l.b16 %v682
        %v883 = vunpack.c.l.b16 %v683
        %v884 = vunpack.c.l.b16 %v684
        %v885 = vunpack.c.l.b16 %v685
        %v886 = vunpack.c.l.b16 %v686
        %v887 = vunpack.c.l.b16 %v687
        %v888 = vunpack.c.l.b16 %v688
        %v889 = vunpack.c.l.b16 %v689
        %v890 = vunpack.c.l.b16 %v690
        %v891 = vunpack.c.l.b16 %v691
        %v892 = vunpack.c.l.b16 %v692
        %v893 = vunpack.c.l.b16 %v693
        %v894 = vunpack.c.l.b16 %v694
        %v895 = vunpack.c.l.b16 %v695
        %v896 = vunpack.c.l.b16 %v696
        %v897 = vunpack.c.l.b16 %v697
        %v898 = vunpack.c.l.b16 %v698
        %v899 = vpack.c.b16 %v802, %v801
        %v900 = vpack.c.b16 %v804, %v803
        %v901 = vpack.c.b16 %v806, %v805
        %v902 = vpack.c.b16 %v808, %v807
        %v903 = vpack.c.b16 %v810, %v809
        %v904 = vpack.c.b16 %v812, %v811
        %v905 = vpack.c.b16 %v814, %v813
        %v906 = vpack.c.b16 %v816, %v815
        %v907 = vpack.c.b16 %v818, %v817
        %v908 = vpack.c.b16 %v820, %v819
        %v909 = vpack.c.b16 %v822, %v821
        %v910 = vpack.c.b16 %v824, %v823
        %v911 = vpack.c.b16 %v826, %v825
        %v912 = vpack.c.b16 %v828, %v827
        %v913 = vpack.c.b16 %v830, %v829
        %v914 = vpack.c.b16 %v832, %v831
        %v915 = vpack.c.b16 %v834, %v833
        %v916 = vpack.c.b16 %v836, %v835
        %v917 = vpack.c.b16 %v838, %v837
        %v918 = vpack.c.b16 %v840, %v839
        %v919 = vpack.c.b16 %v842, %v841
        %v920 = vpack.c.b16 %v844, %v843
        %v921 = vpack.c.b16 %v846, %v845
        %v922 = vpack.c.b16 %v848, %v847
        %v923 = vpack.c.b16 %v850, %v849
        %v924 = vpack.c.b16 %v852, %v851
        %v925 = vpack.c.b16 %v854, %v853
        %v926 = vpack.c.b16 %v856, %v855
        %v927 = vpack.c.b16 %v858, %v857
        %v928 = vpack.c.b16 %v860, %v859
        %v929 = vpack.c.b16 %v862, %v861
        %v930 = vpack.c.b16 %v864, %v863
        %v931 = vpack.c.b16 %v866, %v865
        %v932 = vpack.c.b16 %v868, %v867
        %v933 = vpack.c.b16 %v870, %v869
        %v934 = vpack.c.b16 %v872, %v871
        %v935 = vpack.c.b16 %v874, %v873
        %v936 = vpack.c.b16 %v876, %v875
        %v937 = vpack.c.b16 %v878, %v877
        %v938 = vpack.c.b16 %v880, %v879
        %v939 = vpack.c.b16 %v882, %v881
        %v940 = vpack.c.b16 %v884, %v883
        %v941 = vpack.c.b16 %v886, %v885
        %v942 = vpack.c.b16 %v888, %v887
        %v943 = vpack.c.b16 %v890, %v889
        %v944 = vpack.c.b16 %v892, %v891
        %v945 = vpack.c.b16 %v894, %v893
        %v946 = vpack.c.b16 %v896, %v895
        %v947 = vpack.c.b16 %v898, %v897
        %vm997 = vcmask 130048
        %v999 = vsel %vm997, %v537, 0
        %v1002 = vsel %vm997, %v544, 0
        %v1005 = vsel %vm997, %v551, 0
        %v1008 = vsel %vm997, %v558, 0
        %v1011 = vsel %vm997, %v565, 0
        %v1014 = vsel %vm997, %v572, 0
        %v1017 = vsel %vm997, %v579, 0
        %v1020 = vsel %vm997, %v586, 0
        %v1023 = vsel %vm997, %v593, 0
        %v1026 = vsel %vm997, %v600, 0
        %1028 = vmatpush.bf16.msra.mxu0 %v906
        %1029 = vmatpush.bf16.msra.mxu0 %v905
        %1030 = vmatpush.bf16.msra.mxu0 %v904
        %1031 = vmatpush.bf16.msra.mxu0 %v903
        %1032 = vmatpush.bf16.msra.mxu0 %v902
        %1033 = vmatpush.bf16.msra.mxu0 %v901
        %1034 = vmatpush.bf16.msra.mxu0 %v900
        %1035 = vmatpush.bf16.msra.mxu0 %v899
        %1036 = vmatmul.bf16.gmra.mxu0 %v531
        %v1037 = vpop.f32.mrf.mxu0
        %v1038 = vadd.f32 %v701, %v1037
        %v1039 = vpop.f32.mrf.mxu0
        %v1040 = vadd.f32 %v701, %v1039
        %1041 = vmatmul.bf16.gmra.mxu0 %v538
        %v1042 = vpop.f32.mrf.mxu0
        %v1043 = vadd.f32 %v701, %v1042
        %v1044 = vpop.f32.mrf.mxu0
        %v1045 = vadd.f32 %v701, %v1044
        %1046 = vmatmul.bf16.gmra.mxu0 %v545
        %v1047 = vpop.f32.mrf.mxu0
        %v1048 = vadd.f32 %v701, %v1047
        %v1049 = vpop.f32.mrf.mxu0
        %v1050 = vadd.f32 %v701, %v1049
        %1051 = vmatmul.bf16.gmra.mxu0 %v552
        %v1052 = vpop.f32.mrf.mxu0
        %v1053 = vadd.f32 %v701, %v1052
        %v1054 = vpop.f32.mrf.mxu0
        %v1055 = vadd.f32 %v701, %v1054
        %1056 = vmatmul.bf16.gmra.mxu0 %v559
        %v1057 = vpop.f32.mrf.mxu0
        %v1058 = vadd.f32 %v701, %v1057
        %v1059 = vpop.f32.mrf.mxu0
        %v1060 = vadd.f32 %v701, %v1059
        %1061 = vmatmul.bf16.gmra.mxu0 %v566
        %v1062 = vpop.f32.mrf.mxu0
        %v1063 = vadd.f32 %v701, %v1062
        %v1064 = vpop.f32.mrf.mxu0
        %v1065 = vadd.f32 %v701, %v1064
        %1066 = vmatmul.bf16.gmra.mxu0 %v573
        %v1067 = vpop.f32.mrf.mxu0
        %v1068 = vadd.f32 %v701, %v1067
        %v1069 = vpop.f32.mrf.mxu0
        %v1070 = vadd.f32 %v701, %v1069
        %1071 = vmatmul.bf16.gmra.mxu0 %v580
        %v1072 = vpop.f32.mrf.mxu0
        %v1073 = vadd.f32 %v701, %v1072
        %v1074 = vpop.f32.mrf.mxu0
        %v1075 = vadd.f32 %v701, %v1074
        %1076 = vmatmul.bf16.gmra.mxu0 %v587
        %v1077 = vpop.f32.mrf.mxu0
        %v1078 = vadd.f32 %v701, %v1077
        %v1079 = vpop.f32.mrf.mxu0
        %v1080 = vadd.f32 %v701, %v1079
        %1081 = vmatmul.bf16.gmra.mxu0 %v594
        %v1082 = vpop.f32.mrf.mxu0
        %v1083 = vadd.f32 %v701, %v1082
        %v1084 = vpop.f32.mrf.mxu0
        %1085 = vdwg.mxu0
        %1086 = vmatpush.bf16.msra.mxu0 %v914
        %1087 = vmatpush.bf16.msra.mxu0 %v913
        %1088 = vmatpush.bf16.msra.mxu0 %v912
        %1089 = vmatpush.bf16.msra.mxu0 %v911
        %1090 = vmatpush.bf16.msra.mxu0 %v910
        %1091 = vmatpush.bf16.msra.mxu0 %v909
        %1092 = vmatpush.bf16.msra.mxu0 %v908
        %1093 = vmatpush.bf16.msra.mxu0 %v907
        %1094 = vmatmul.bf16.gmra.mxu0 %v532
        %v1095 = vpop.f32.mrf.mxu0
        %v1096 = vadd.f32 %v1038, %v1095
        %v1097 = vpop.f32.mrf.mxu0
        %v1098 = vadd.f32 %v1040, %v1097
        %1099 = vmatmul.bf16.gmra.mxu0 %v539
        %v1100 = vpop.f32.mrf.mxu0
        %v1101 = vadd.f32 %v1043, %v1100
        %v1102 = vpop.f32.mrf.mxu0
        %v1103 = vadd.f32 %v1045, %v1102
        %1104 = vmatmul.bf16.gmra.mxu0 %v546
        %v1105 = vpop.f32.mrf.mxu0
        %v1106 = vadd.f32 %v1048, %v1105
        %v1107 = vpop.f32.mrf.mxu0
        %v1108 = vadd.f32 %v1050, %v1107
        %1109 = vmatmul.bf16.gmra.mxu0 %v553
        %v1110 = vpop.f32.mrf.mxu0
        %v1111 = vadd.f32 %v1053, %v1110
        %v1112 = vpop.f32.mrf.mxu0
        %v1113 = vadd.f32 %v1055, %v1112
        %1114 = vmatmul.bf16.gmra.mxu0 %v560
        %v1115 = vpop.f32.mrf.mxu0
        %v1116 = vadd.f32 %v1058, %v1115
        %v1117 = vpop.f32.mrf.mxu0
        %v1118 = vadd.f32 %v1060, %v1117
        %1119 = vmatmul.bf16.gmra.mxu0 %v567
        %v1120 = vpop.f32.mrf.mxu0
        %v1121 = vadd.f32 %v1063, %v1120
        %v1122 = vpop.f32.mrf.mxu0
        %v1123 = vadd.f32 %v1065, %v1122
        %1124 = vmatmul.bf16.gmra.mxu0 %v574
        %v1125 = vpop.f32.mrf.mxu0
        %v1126 = vadd.f32 %v1068, %v1125
        %v1127 = vpop.f32.mrf.mxu0
        %v1128 = vadd.f32 %v1070, %v1127
        %1129 = vmatmul.bf16.gmra.mxu0 %v581
        %v1130 = vpop.f32.mrf.mxu0
        %v1131 = vadd.f32 %v1073, %v1130
        %v1132 = vpop.f32.mrf.mxu0
        %v1133 = vadd.f32 %v1075, %v1132
        %1134 = vmatmul.bf16.gmra.mxu0 %v588
        %v1135 = vpop.f32.mrf.mxu0
        %v1136 = vadd.f32 %v1078, %v1135
        %v1137 = vpop.f32.mrf.mxu0
        %v1138 = vadd.f32 %v1080, %v1137
        %1139 = vmatmul.bf16.gmra.mxu0 %v595
        %v1140 = vpop.f32.mrf.mxu0
        %v1141 = vadd.f32 %v1083, %v1140
        %v1142 = vpop.f32.mrf.mxu0
        %1143 = vdwg.mxu0
        %1144 = vmatpush.bf16.msra.mxu0 %v922
        %1145 = vmatpush.bf16.msra.mxu0 %v921
        %1146 = vmatpush.bf16.msra.mxu0 %v920
        %1147 = vmatpush.bf16.msra.mxu0 %v919
        %1148 = vmatpush.bf16.msra.mxu0 %v918
        %1149 = vmatpush.bf16.msra.mxu0 %v917
        %1150 = vmatpush.bf16.msra.mxu0 %v916
        %1151 = vmatpush.bf16.msra.mxu0 %v915
        %1152 = vmatmul.bf16.gmra.mxu0 %v533
        %v1153 = vpop.f32.mrf.mxu0
        %v1154 = vadd.f32 %v1096, %v1153
        %v1155 = vpop.f32.mrf.mxu0
        %v1156 = vadd.f32 %v1098, %v1155
        %1157 = vmatmul.bf16.gmra.mxu0 %v540
        %v1158 = vpop.f32.mrf.mxu0
        %v1159 = vadd.f32 %v1101, %v1158
        %v1160 = vpop.f32.mrf.mxu0
        %v1161 = vadd.f32 %v1103, %v1160
        %1162 = vmatmul.bf16.gmra.mxu0 %v547
        %v1163 = vpop.f32.mrf.mxu0
        %v1164 = vadd.f32 %v1106, %v1163
        %v1165 = vpop.f32.mrf.mxu0
        %v1166 = vadd.f32 %v1108, %v1165
        %1167 = vmatmul.bf16.gmra.mxu0 %v554
        %v1168 = vpop.f32.mrf.mxu0
        %v1169 = vadd.f32 %v1111, %v1168
        %v1170 = vpop.f32.mrf.mxu0
        %v1171 = vadd.f32 %v1113, %v1170
        %1172 = vmatmul.bf16.gmra.mxu0 %v561
        %v1173 = vpop.f32.mrf.mxu0
        %v1174 = vadd.f32 %v1116, %v1173
        %v1175 = vpop.f32.mrf.mxu0
        %v1176 = vadd.f32 %v1118, %v1175
        %1177 = vmatmul.bf16.gmra.mxu0 %v568
        %v1178 = vpop.f32.mrf.mxu0
        %v1179 = vadd.f32 %v1121, %v1178
        %v1180 = vpop.f32.mrf.mxu0
        %v1181 = vadd.f32 %v1123, %v1180
        %1182 = vmatmul.bf16.gmra.mxu0 %v575
        %v1183 = vpop.f32.mrf.mxu0
        %v1184 = vadd.f32 %v1126, %v1183
        %v1185 = vpop.f32.mrf.mxu0
        %v1186 = vadd.f32 %v1128, %v1185
        %1187 = vmatmul.bf16.gmra.mxu0 %v582
        %v1188 = vpop.f32.mrf.mxu0
        %v1189 = vadd.f32 %v1131, %v1188
        %v1190 = vpop.f32.mrf.mxu0
        %v1191 = vadd.f32 %v1133, %v1190
        %1192 = vmatmul.bf16.gmra.mxu0 %v589
        %v1193 = vpop.f32.mrf.mxu0
        %v1194 = vadd.f32 %v1136, %v1193
        %v1195 = vpop.f32.mrf.mxu0
        %v1196 = vadd.f32 %v1138, %v1195
        %1197 = vmatmul.bf16.gmra.mxu0 %v596
        %v1198 = vpop.f32.mrf.mxu0
        %v1199 = vadd.f32 %v1141, %v1198
        %v1200 = vpop.f32.mrf.mxu0
        %1201 = vdwg.mxu0
        %1202 = vmatpush.bf16.msra.mxu0 %v930
        %1203 = vmatpush.bf16.msra.mxu0 %v929
        %1204 = vmatpush.bf16.msra.mxu0 %v928
        %1205 = vmatpush.bf16.msra.mxu0 %v927
        %1206 = vmatpush.bf16.msra.mxu0 %v926
        %1207 = vmatpush.bf16.msra.mxu0 %v925
        %1208 = vmatpush.bf16.msra.mxu0 %v924
        %1209 = vmatpush.bf16.msra.mxu0 %v923
        %1210 = vmatmul.bf16.gmra.mxu0 %v534
        %v1211 = vpop.f32.mrf.mxu0
        %v1212 = vadd.f32 %v1154, %v1211
        %v1213 = vpop.f32.mrf.mxu0
        %v1214 = vadd.f32 %v1156, %v1213
        %1215 = vmatmul.bf16.gmra.mxu0 %v541
        %v1216 = vpop.f32.mrf.mxu0
        %v1217 = vadd.f32 %v1159, %v1216
        %v1218 = vpop.f32.mrf.mxu0
        %v1219 = vadd.f32 %v1161, %v1218
        %1220 = vmatmul.bf16.gmra.mxu0 %v548
        %v1221 = vpop.f32.mrf.mxu0
        %v1222 = vadd.f32 %v1164, %v1221
        %v1223 = vpop.f32.mrf.mxu0
        %v1224 = vadd.f32 %v1166, %v1223
        %1225 = vmatmul.bf16.gmra.mxu0 %v555
        %v1226 = vpop.f32.mrf.mxu0
        %v1227 = vadd.f32 %v1169, %v1226
        %v1228 = vpop.f32.mrf.mxu0
        %v1229 = vadd.f32 %v1171, %v1228
        %1230 = vmatmul.bf16.gmra.mxu0 %v562
        %v1231 = vpop.f32.mrf.mxu0
        %v1232 = vadd.f32 %v1174, %v1231
        %v1233 = vpop.f32.mrf.mxu0
        %v1234 = vadd.f32 %v1176, %v1233
        %1235 = vmatmul.bf16.gmra.mxu0 %v569
        %v1236 = vpop.f32.mrf.mxu0
        %v1237 = vadd.f32 %v1179, %v1236
        %v1238 = vpop.f32.mrf.mxu0
        %v1239 = vadd.f32 %v1181, %v1238
        %1240 = vmatmul.bf16.gmra.mxu0 %v576
        %v1241 = vpop.f32.mrf.mxu0
        %v1242 = vadd.f32 %v1184, %v1241
        %v1243 = vpop.f32.mrf.mxu0
        %v1244 = vadd.f32 %v1186, %v1243
        %1245 = vmatmul.bf16.gmra.mxu0 %v583
        %v1246 = vpop.f32.mrf.mxu0
        %v1247 = vadd.f32 %v1189, %v1246
        %v1248 = vpop.f32.mrf.mxu0
        %v1249 = vadd.f32 %v1191, %v1248
        %1250 = vmatmul.bf16.gmra.mxu0 %v590
        %v1251 = vpop.f32.mrf.mxu0
        %v1252 = vadd.f32 %v1194, %v1251
        %v1253 = vpop.f32.mrf.mxu0
        %v1254 = vadd.f32 %v1196, %v1253
        %1255 = vmatmul.bf16.gmra.mxu0 %v597
        %v1256 = vpop.f32.mrf.mxu0
        %v1257 = vadd.f32 %v1199, %v1256
        %v1258 = vpop.f32.mrf.mxu0
        %1259 = vdwg.mxu0
        %1260 = vmatpush.bf16.msra.mxu0 %v938
        %1261 = vmatpush.bf16.msra.mxu0 %v937
        %1262 = vmatpush.bf16.msra.mxu0 %v936
        %1263 = vmatpush.bf16.msra.mxu0 %v935
        %1264 = vmatpush.bf16.msra.mxu0 %v934
        %1265 = vmatpush.bf16.msra.mxu0 %v933
        %1266 = vmatpush.bf16.msra.mxu0 %v932
        %1267 = vmatpush.bf16.msra.mxu0 %v931
        %1268 = vmatmul.bf16.gmra.mxu0 %v535
        %v1269 = vpop.f32.mrf.mxu0
        %v1270 = vadd.f32 %v1212, %v1269
        %v1271 = vpop.f32.mrf.mxu0
        %v1272 = vadd.f32 %v1214, %v1271
        %1273 = vmatmul.bf16.gmra.mxu0 %v542
        %v1274 = vpop.f32.mrf.mxu0
        %v1275 = vadd.f32 %v1217, %v1274
        %v1276 = vpop.f32.mrf.mxu0
        %v1277 = vadd.f32 %v1219, %v1276
        %1278 = vmatmul.bf16.gmra.mxu0 %v549
        %v1279 = vpop.f32.mrf.mxu0
        %v1280 = vadd.f32 %v1222, %v1279
        %v1281 = vpop.f32.mrf.mxu0
        %v1282 = vadd.f32 %v1224, %v1281
        %1283 = vmatmul.bf16.gmra.mxu0 %v556
        %v1284 = vpop.f32.mrf.mxu0
        %v1285 = vadd.f32 %v1227, %v1284
        %v1286 = vpop.f32.mrf.mxu0
        %v1287 = vadd.f32 %v1229, %v1286
        %1288 = vmatmul.bf16.gmra.mxu0 %v563
        %v1289 = vpop.f32.mrf.mxu0
        %v1290 = vadd.f32 %v1232, %v1289
        %v1291 = vpop.f32.mrf.mxu0
        %v1292 = vadd.f32 %v1234, %v1291
        %1293 = vmatmul.bf16.gmra.mxu0 %v570
        %v1294 = vpop.f32.mrf.mxu0
        %v1295 = vadd.f32 %v1237, %v1294
        %v1296 = vpop.f32.mrf.mxu0
        %v1297 = vadd.f32 %v1239, %v1296
        %1298 = vmatmul.bf16.gmra.mxu0 %v577
        %v1299 = vpop.f32.mrf.mxu0
        %v1300 = vadd.f32 %v1242, %v1299
        %v1301 = vpop.f32.mrf.mxu0
        %v1302 = vadd.f32 %v1244, %v1301
        %1303 = vmatmul.bf16.gmra.mxu0 %v584
        %v1304 = vpop.f32.mrf.mxu0
        %v1305 = vadd.f32 %v1247, %v1304
        %v1306 = vpop.f32.mrf.mxu0
        %v1307 = vadd.f32 %v1249, %v1306
        %1308 = vmatmul.bf16.gmra.mxu0 %v591
        %v1309 = vpop.f32.mrf.mxu0
        %v1310 = vadd.f32 %v1252, %v1309
        %v1311 = vpop.f32.mrf.mxu0
        %v1312 = vadd.f32 %v1254, %v1311
        %1313 = vmatmul.bf16.gmra.mxu0 %v598
        %v1314 = vpop.f32.mrf.mxu0
        %v1315 = vadd.f32 %v1257, %v1314
        %v1316 = vpop.f32.mrf.mxu0
        %1317 = vdwg.mxu0
        %1318 = vmatpush.bf16.msra.mxu0 %v946
        %1319 = vmatpush.bf16.msra.mxu0 %v945
        %1320 = vmatpush.bf16.msra.mxu0 %v944
        %1321 = vmatpush.bf16.msra.mxu0 %v943
        %1322 = vmatpush.bf16.msra.mxu0 %v942
        %1323 = vmatpush.bf16.msra.mxu0 %v941
        %1324 = vmatpush.bf16.msra.mxu0 %v940
        %1325 = vmatpush.bf16.msra.mxu0 %v939
        %1326 = vmatmul.bf16.gmra.mxu0 %v536
        %v1327 = vpop.f32.mrf.mxu0
        %v1328 = vadd.f32 %v1270, %v1327
        %v1329 = vpop.f32.mrf.mxu0
        %v1330 = vadd.f32 %v1272, %v1329
        %1331 = vmatmul.bf16.gmra.mxu0 %v543
        %v1332 = vpop.f32.mrf.mxu0
        %v1333 = vadd.f32 %v1275, %v1332
        %v1334 = vpop.f32.mrf.mxu0
        %v1335 = vadd.f32 %v1277, %v1334
        %1336 = vmatmul.bf16.gmra.mxu0 %v550
        %v1337 = vpop.f32.mrf.mxu0
        %v1338 = vadd.f32 %v1280, %v1337
        %v1339 = vpop.f32.mrf.mxu0
        %v1340 = vadd.f32 %v1282, %v1339
        %1341 = vmatmul.bf16.gmra.mxu0 %v557
        %v1342 = vpop.f32.mrf.mxu0
        %v1343 = vadd.f32 %v1285, %v1342
        %v1344 = vpop.f32.mrf.mxu0
        %v1345 = vadd.f32 %v1287, %v1344
        %1346 = vmatmul.bf16.gmra.mxu0 %v564
        %v1347 = vpop.f32.mrf.mxu0
        %v1348 = vadd.f32 %v1290, %v1347
        %v1349 = vpop.f32.mrf.mxu0
        %v1350 = vadd.f32 %v1292, %v1349
        %1351 = vmatmul.bf16.gmra.mxu0 %v571
        %v1352 = vpop.f32.mrf.mxu0
        %v1353 = vadd.f32 %v1295, %v1352
        %v1354 = vpop.f32.mrf.mxu0
        %v1355 = vadd.f32 %v1297, %v1354
        %1356 = vmatmul.bf16.gmra.mxu0 %v578
        %v1357 = vpop.f32.mrf.mxu0
        %v1358 = vadd.f32 %v1300, %v1357
        %v1359 = vpop.f32.mrf.mxu0
        %v1360 = vadd.f32 %v1302, %v1359
        %1361 = vmatmul.bf16.gmra.mxu0 %v585
        %v1362 = vpop.f32.mrf.mxu0
        %v1363 = vadd.f32 %v1305, %v1362
        %v1364 = vpop.f32.mrf.mxu0
        %v1365 = vadd.f32 %v1307, %v1364
        %1366 = vmatmul.bf16.gmra.mxu0 %v592
        %v1367 = vpop.f32.mrf.mxu0
        %v1368 = vadd.f32 %v1310, %v1367
        %v1369 = vpop.f32.mrf.mxu0
        %v1370 = vadd.f32 %v1312, %v1369
        %1371 = vmatmul.bf16.gmra.mxu0 %v599
        %v1372 = vpop.f32.mrf.mxu0
        %v1373 = vadd.f32 %v1315, %v1372
        %v1374 = vpop.f32.mrf.mxu0
        %1375 = vdwg.mxu0
        %1376 = vmatpush.bf16.msra.mxu0 0
        %1377 = vmatpush.bf16.msra.mxu0 0
        %1378 = vmatpush.bf16.msra.mxu0 0
        %1379 = vmatpush.bf16.msra.mxu0 0
        %1380 = vmatpush.bf16.msra.mxu0 0
        %1381 = vmatpush.bf16.msra.mxu0 0
        %1382 = vmatpush.bf16.msra.mxu0 0
        %1383 = vmatpush.bf16.msra.mxu0 %v947
        %1384 = vmatmul.bf16.gmra.mxu0 %v999
        %v1385 = vpop.f32.mrf.mxu0
        %v1386 = vadd.f32 %v1328, %v1385
        %v1387 = vpop.f32.mrf.mxu0
        %v1388 = vadd.f32 %v1330, %v1387
        %1389 = vmatmul.bf16.gmra.mxu0 %v1002
        %v1390 = vpop.f32.mrf.mxu0
        %v1391 = vadd.f32 %v1333, %v1390
        %v1392 = vpop.f32.mrf.mxu0
        %v1393 = vadd.f32 %v1335, %v1392
        %1394 = vmatmul.bf16.gmra.mxu0 %v1005
        %v1395 = vpop.f32.mrf.mxu0
        %v1396 = vadd.f32 %v1338, %v1395
        %v1397 = vpop.f32.mrf.mxu0
        %v1398 = vadd.f32 %v1340, %v1397
        %1399 = vmatmul.bf16.gmra.mxu0 %v1008
        %v1400 = vpop.f32.mrf.mxu0
        %v1401 = vadd.f32 %v1343, %v1400
        %v1402 = vpop.f32.mrf.mxu0
        %v1403 = vadd.f32 %v1345, %v1402
        %1404 = vmatmul.bf16.gmra.mxu0 %v1011
        %v1405 = vpop.f32.mrf.mxu0
        %v1406 = vadd.f32 %v1348, %v1405
        %v1407 = vpop.f32.mrf.mxu0
        %v1408 = vadd.f32 %v1350, %v1407
        %1409 = vmatmul.bf16.gmra.mxu0 %v1014
        %v1410 = vpop.f32.mrf.mxu0
        %v1411 = vadd.f32 %v1353, %v1410
        %v1412 = vpop.f32.mrf.mxu0
        %v1413 = vadd.f32 %v1355, %v1412
        %1414 = vmatmul.bf16.gmra.mxu0 %v1017
        %v1415 = vpop.f32.mrf.mxu0
        %v1416 = vadd.f32 %v1358, %v1415
        %v1417 = vpop.f32.mrf.mxu0
        %v1418 = vadd.f32 %v1360, %v1417
        %1419 = vmatmul.bf16.gmra.mxu0 %v1020
        %v1420 = vpop.f32.mrf.mxu0
        %v1421 = vadd.f32 %v1363, %v1420
        %v1422 = vpop.f32.mrf.mxu0
        %v1423 = vadd.f32 %v1365, %v1422
        %1424 = vmatmul.bf16.gmra.mxu0 %v1023
        %v1425 = vpop.f32.mrf.mxu0
        %v1426 = vadd.f32 %v1368, %v1425
        %v1427 = vpop.f32.mrf.mxu0
        %v1428 = vadd.f32 %v1370, %v1427
        %1429 = vmatmul.bf16.gmra.mxu0 %v1026
        %v1430 = vpop.f32.mrf.mxu0
        %v1431 = vadd.f32 %v1373, %v1430
        %v1432 = vpop.f32.mrf.mxu0
        %1433 = vdwg.mxu0
        %v1434 = vmax.f32 %v1386, 0.0
        %v1435 = vmax.f32 %v1388, 0.0
        %v1436 = vmax.f32 %v1391, 0.0
        %v1437 = vmax.f32 %v1393, 0.0
        %v1438 = vmax.f32 %v1396, 0.0
        %v1439 = vmax.f32 %v1398, 0.0
        %v1440 = vmax.f32 %v1401, 0.0
        %v1441 = vmax.f32 %v1403, 0.0
        %v1442 = vmax.f32 %v1406, 0.0
        %v1443 = vmax.f32 %v1408, 0.0
        %v1444 = vmax.f32 %v1411, 0.0
        %v1445 = vmax.f32 %v1413, 0.0
        %v1446 = vmax.f32 %v1416, 0.0
        %v1447 = vmax.f32 %v1418, 0.0
        %v1448 = vmax.f32 %v1421, 0.0
        %v1449 = vmax.f32 %v1423, 0.0
        %v1450 = vmax.f32 %v1426, 0.0
        %v1451 = vmax.f32 %v1428, 0.0
        %v1452 = vmax.f32 %v1431, 0.0
        %v1453 = vpack.c.bf16 %v1435, %v1434
        %v1454 = vpack.c.bf16 %v1437, %v1436
        %v1455 = vpack.c.bf16 %v1439, %v1438
        %v1456 = vpack.c.bf16 %v1441, %v1440
        %v1457 = vpack.c.bf16 %v1443, %v1442
        %v1458 = vpack.c.bf16 %v1445, %v1444
        %v1459 = vpack.c.bf16 %v1447, %v1446
        %v1460 = vpack.c.bf16 %v1449, %v1448
        %v1461 = vpack.c.bf16 %v1451, %v1450
        %v1462 = vpack.c.bf16 %v1452, %v1452
        %v1463 = vld [vmem:[#allocation7] sm:$0xf]
        %v1464 = vld [vmem:[#allocation7 + $0x4] sm:$0xf]
        %v1465 = vld [vmem:[#allocation7 + $0x8] sm:$0xf]
        %v1466 = vld [vmem:[#allocation7 + $0xc] sm:$0xf]
        %v1467 = vld [vmem:[#allocation7 + $0x10] sm:$0xf]
        %v1468 = vld [vmem:[#allocation7 + $0x14] sm:$0xf]
        %v1469 = vld [vmem:[#allocation7 + $0x18] sm:$0xf]
        %v1470 = vld [vmem:[#allocation7 + $0x1c] sm:$0xf]
        %v1471 = vld [vmem:[#allocation7 + $0x20] sm:$0xf]
        %v1472 = vld [vmem:[#allocation7 + $0x24] sm:$0xf]
        %v1473 = vld [vmem:[#allocation7 + $0x28] sm:$0xf]
        %v1474 = vld [vmem:[#allocation7 + $0x2c] sm:$0xf]
        %v1475 = vld [vmem:[#allocation7 + $0x30] sm:$0xf]
        %v1476 = vld [vmem:[#allocation7 + $0x34] sm:$0xf]
        %v1477 = vld [vmem:[#allocation7 + $0x38] sm:$0xf]
        %v1478 = vld [vmem:[#allocation7 + $0x3c] sm:$0xf]
        %v1479 = vld [vmem:[#allocation9] sm:$0x1]
        %v1481 = vperm.slane %v1479, 0
        %v1499 = vunpack.c.l.b16 %v1463
        %v1500 = vunpack.c.l.b16 %v1464
        %v1501 = vunpack.c.l.b16 %v1465
        %v1502 = vunpack.c.l.b16 %v1466
        %v1503 = vunpack.c.l.b16 %v1467
        %v1504 = vunpack.c.l.b16 %v1468
        %v1505 = vunpack.c.l.b16 %v1469
        %v1506 = vunpack.c.l.b16 %v1470
        %v1507 = vunpack.c.l.b16 %v1471
        %v1508 = vunpack.c.l.b16 %v1472
        %v1509 = vunpack.c.l.b16 %v1473
        %v1510 = vunpack.c.l.b16 %v1474
        %v1511 = vunpack.c.l.b16 %v1475
        %v1512 = vunpack.c.l.b16 %v1476
        %v1513 = vunpack.c.l.b16 %v1477
        %v1514 = vunpack.c.l.b16 %v1478
        %v1515 = vpack.c.b16 %v1500, %v1499
        %v1516 = vpack.c.b16 %v1502, %v1501
        %v1517 = vpack.c.b16 %v1504, %v1503
        %v1518 = vpack.c.b16 %v1506, %v1505
        %v1519 = vpack.c.b16 %v1508, %v1507
        %v1520 = vpack.c.b16 %v1510, %v1509
        %v1521 = vpack.c.b16 %v1512, %v1511
        %v1522 = vpack.c.b16 %v1514, %v1513
        %1531 = vmatpush.bf16.msra.mxu0 %v1522
        %1532 = vmatpush.bf16.msra.mxu0 %v1521
        %1533 = vmatpush.bf16.msra.mxu0 %v1520
        %1534 = vmatpush.bf16.msra.mxu0 %v1519
        %1535 = vmatpush.bf16.msra.mxu0 %v1518
        %1536 = vmatpush.bf16.msra.mxu0 %v1517
        %1537 = vmatpush.bf16.msra.mxu0 %v1516
        %1538 = vmatpush.bf16.msra.mxu0 %v1515
        %1539 = vmatmul.bf16.gmra.mxu0 %v1453
        %v1540 = vpop.f32.mrf.mxu0
        %v1541 = vadd.f32 %v1481, %v1540
        %v1542 = vpop.f32.mrf.mxu0
        %v1543 = vadd.f32 %v1481, %v1542
        %1544 = vmatmul.bf16.gmra.mxu0 %v1454
        %v1545 = vpop.f32.mrf.mxu0
        %v1546 = vadd.f32 %v1481, %v1545
        %v1547 = vpop.f32.mrf.mxu0
        %v1548 = vadd.f32 %v1481, %v1547
        %1549 = vmatmul.bf16.gmra.mxu0 %v1455
        %v1550 = vpop.f32.mrf.mxu0
        %v1551 = vadd.f32 %v1481, %v1550
        %v1552 = vpop.f32.mrf.mxu0
        %v1553 = vadd.f32 %v1481, %v1552
        %1554 = vmatmul.bf16.gmra.mxu0 %v1456
        %v1555 = vpop.f32.mrf.mxu0
        %v1556 = vadd.f32 %v1481, %v1555
        %v1557 = vpop.f32.mrf.mxu0
        %v1558 = vadd.f32 %v1481, %v1557
        %1559 = vmatmul.bf16.gmra.mxu0 %v1457
        %v1560 = vpop.f32.mrf.mxu0
        %v1561 = vadd.f32 %v1481, %v1560
        %v1562 = vpop.f32.mrf.mxu0
        %v1563 = vadd.f32 %v1481, %v1562
        %1564 = vmatmul.bf16.gmra.mxu0 %v1458
        %v1565 = vpop.f32.mrf.mxu0
        %v1566 = vadd.f32 %v1481, %v1565
        %v1567 = vpop.f32.mrf.mxu0
        %v1568 = vadd.f32 %v1481, %v1567
        %1569 = vmatmul.bf16.gmra.mxu0 %v1459
        %v1570 = vpop.f32.mrf.mxu0
        %v1571 = vadd.f32 %v1481, %v1570
        %v1572 = vpop.f32.mrf.mxu0
        %v1573 = vadd.f32 %v1481, %v1572
        %1574 = vmatmul.bf16.gmra.mxu0 %v1460
        %v1575 = vpop.f32.mrf.mxu0
        %v1576 = vadd.f32 %v1481, %v1575
        %v1577 = vpop.f32.mrf.mxu0
        %v1578 = vadd.f32 %v1481, %v1577
        %1579 = vmatmul.bf16.gmra.mxu0 %v1461
        %v1580 = vpop.f32.mrf.mxu0
        %v1581 = vadd.f32 %v1481, %v1580
        %v1582 = vpop.f32.mrf.mxu0
        %v1583 = vadd.f32 %v1481, %v1582
        %1584 = vmatmul.bf16.gmra.mxu0 %v1462
        %v1585 = vpop.f32.mrf.mxu0
        %v1586 = vadd.f32 %v1481, %v1585
        %v1587 = vpop.f32.mrf.mxu0
        %1588 = vdwg.mxu0
        %v1589 = vmax.f32 %v1541, 0.0
        %v1590 = vmax.f32 %v1543, 0.0
        %v1591 = vmax.f32 %v1546, 0.0
        %v1592 = vmax.f32 %v1548, 0.0
        %v1593 = vmax.f32 %v1551, 0.0
        %v1594 = vmax.f32 %v1553, 0.0
        %v1595 = vmax.f32 %v1556, 0.0
        %v1596 = vmax.f32 %v1558, 0.0
        %v1597 = vmax.f32 %v1561, 0.0
        %v1598 = vmax.f32 %v1563, 0.0
        %v1599 = vmax.f32 %v1566, 0.0
        %v1600 = vmax.f32 %v1568, 0.0
        %v1601 = vmax.f32 %v1571, 0.0
        %v1602 = vmax.f32 %v1573, 0.0
        %v1603 = vmax.f32 %v1576, 0.0
        %v1604 = vmax.f32 %v1578, 0.0
        %v1605 = vmax.f32 %v1581, 0.0
        %v1606 = vmax.f32 %v1583, 0.0
        %v1607 = vmax.f32 %v1586, 0.0
        %v1608 = vpack.c.bf16 %v1590, %v1589
        %v1609 = vpack.c.bf16 %v1592, %v1591
        %v1610 = vpack.c.bf16 %v1594, %v1593
        %v1611 = vpack.c.bf16 %v1596, %v1595
        %v1612 = vpack.c.bf16 %v1598, %v1597
        %v1613 = vpack.c.bf16 %v1600, %v1599
        %v1614 = vpack.c.bf16 %v1602, %v1601
        %v1615 = vpack.c.bf16 %v1604, %v1603
        %v1616 = vpack.c.bf16 %v1606, %v1605
        %v1617 = vpack.c.bf16 %v1607, %v1607
        %v1618 = vld [vmem:[#allocation10] sm:$0xf]
        %v1619 = vld [vmem:[#allocation10 + $0x4] sm:$0xf]
        %v1620 = vld [vmem:[#allocation10 + $0x8] sm:$0xf]
        %v1621 = vld [vmem:[#allocation10 + $0xc] sm:$0xf]
        %v1622 = vld [vmem:[#allocation10 + $0x10] sm:$0xf]
        %v1623 = vld [vmem:[#allocation10 + $0x14] sm:$0xf]
        %v1624 = vld [vmem:[#allocation10 + $0x18] sm:$0xf]
        %v1625 = vld [vmem:[#allocation10 + $0x1c] sm:$0xf]
        %v1626 = vld [vmem:[#allocation10 + $0x20] sm:$0xf]
        %v1627 = vld [vmem:[#allocation10 + $0x24] sm:$0xf]
        %v1628 = vld [vmem:[#allocation10 + $0x28] sm:$0xf]
        %v1629 = vld [vmem:[#allocation10 + $0x2c] sm:$0xf]
        %v1630 = vld [vmem:[#allocation10 + $0x30] sm:$0xf]
        %v1631 = vld [vmem:[#allocation10 + $0x34] sm:$0xf]
        %v1632 = vld [vmem:[#allocation10 + $0x38] sm:$0xf]
        %v1633 = vld [vmem:[#allocation10 + $0x3c] sm:$0xf]
        %v1634 = vld [vmem:[#allocation12] sm:$0x1]
        %v1636 = vperm.slane %v1634, 0
        %v1654 = vunpack.c.l.b16 %v1618
        %v1655 = vunpack.c.l.b16 %v1619
        %v1656 = vunpack.c.l.b16 %v1620
        %v1657 = vunpack.c.l.b16 %v1621
        %v1658 = vunpack.c.l.b16 %v1622
        %v1659 = vunpack.c.l.b16 %v1623
        %v1660 = vunpack.c.l.b16 %v1624
        %v1661 = vunpack.c.l.b16 %v1625
        %v1662 = vunpack.c.l.b16 %v1626
        %v1663 = vunpack.c.l.b16 %v1627
        %v1664 = vunpack.c.l.b16 %v1628
        %v1665 = vunpack.c.l.b16 %v1629
        %v1666 = vunpack.c.l.b16 %v1630
        %v1667 = vunpack.c.l.b16 %v1631
        %v1668 = vunpack.c.l.b16 %v1632
        %v1669 = vunpack.c.l.b16 %v1633
        %v1670 = vpack.c.b16 %v1655, %v1654
        %v1671 = vpack.c.b16 %v1657, %v1656
        %v1672 = vpack.c.b16 %v1659, %v1658
        %v1673 = vpack.c.b16 %v1661, %v1660
        %v1674 = vpack.c.b16 %v1663, %v1662
        %v1675 = vpack.c.b16 %v1665, %v1664
        %v1676 = vpack.c.b16 %v1667, %v1666
        %v1677 = vpack.c.b16 %v1669, %v1668
        %1686 = vmatpush.bf16.msra.mxu0 %v1677
        %1687 = vmatpush.bf16.msra.mxu0 %v1676
        %1688 = vmatpush.bf16.msra.mxu0 %v1675
        %1689 = vmatpush.bf16.msra.mxu0 %v1674
        %1690 = vmatpush.bf16.msra.mxu0 %v1673
        %1691 = vmatpush.bf16.msra.mxu0 %v1672
        %1692 = vmatpush.bf16.msra.mxu0 %v1671
        %1693 = vmatpush.bf16.msra.mxu0 %v1670
        %1694 = vmatmul.bf16.gmra.mxu0 %v1608
        %v1695 = vpop.f32.mrf.mxu0
        %v1696 = vadd.f32 %v1636, %v1695
        %v1697 = vpop.f32.mrf.mxu0
        %v1698 = vadd.f32 %v1636, %v1697
        %1699 = vmatmul.bf16.gmra.mxu0 %v1609
        %v1700 = vpop.f32.mrf.mxu0
        %v1701 = vadd.f32 %v1636, %v1700
        %v1702 = vpop.f32.mrf.mxu0
        %v1703 = vadd.f32 %v1636, %v1702
        %1704 = vmatmul.bf16.gmra.mxu0 %v1610
        %v1705 = vpop.f32.mrf.mxu0
        %v1706 = vadd.f32 %v1636, %v1705
        %v1707 = vpop.f32.mrf.mxu0
        %v1708 = vadd.f32 %v1636, %v1707
        %1709 = vmatmul.bf16.gmra.mxu0 %v1611
        %v1710 = vpop.f32.mrf.mxu0
        %v1711 = vadd.f32 %v1636, %v1710
        %v1712 = vpop.f32.mrf.mxu0
        %v1713 = vadd.f32 %v1636, %v1712
        %1714 = vmatmul.bf16.gmra.mxu0 %v1612
        %v1715 = vpop.f32.mrf.mxu0
        %v1716 = vadd.f32 %v1636, %v1715
        %v1717 = vpop.f32.mrf.mxu0
        %v1718 = vadd.f32 %v1636, %v1717
        %1719 = vmatmul.bf16.gmra.mxu0 %v1613
        %v1720 = vpop.f32.mrf.mxu0
        %v1721 = vadd.f32 %v1636, %v1720
        %v1722 = vpop.f32.mrf.mxu0
        %v1723 = vadd.f32 %v1636, %v1722
        %1724 = vmatmul.bf16.gmra.mxu0 %v1614
        %v1725 = vpop.f32.mrf.mxu0
        %v1726 = vadd.f32 %v1636, %v1725
        %v1727 = vpop.f32.mrf.mxu0
        %v1728 = vadd.f32 %v1636, %v1727
        %1729 = vmatmul.bf16.gmra.mxu0 %v1615
        %v1730 = vpop.f32.mrf.mxu0
        %v1731 = vadd.f32 %v1636, %v1730
        %v1732 = vpop.f32.mrf.mxu0
        %v1733 = vadd.f32 %v1636, %v1732
        %1734 = vmatmul.bf16.gmra.mxu0 %v1616
        %v1735 = vpop.f32.mrf.mxu0
        %v1736 = vadd.f32 %v1636, %v1735
        %v1737 = vpop.f32.mrf.mxu0
        %v1738 = vadd.f32 %v1636, %v1737
        %1739 = vmatmul.bf16.gmra.mxu0 %v1617
        %v1740 = vpop.f32.mrf.mxu0
        %v1741 = vadd.f32 %v1636, %v1740
        %v1742 = vpop.f32.mrf.mxu0
        %1743 = vdwg.mxu0
        %1744 = vst [vmem:[%s395] sm:$0xff] %v1696
        %1745 = vst [vmem:[%s395 + $0x8] sm:$0xff] %v1698
        %1746 = vst [vmem:[%s395 + $0x10] sm:$0xff] %v1701
        %1747 = vst [vmem:[%s395 + $0x18] sm:$0xff] %v1703
        %1748 = vst [vmem:[%s395 + $0x20] sm:$0xff] %v1706
        %1749 = vst [vmem:[%s395 + $0x28] sm:$0xff] %v1708
        %1750 = vst [vmem:[%s395 + $0x30] sm:$0xff] %v1711
        %1751 = vst [vmem:[%s395 + $0x38] sm:$0xff] %v1713
        %1752 = vst [vmem:[%s395 + $0x40] sm:$0xff] %v1716
        %1753 = vst [vmem:[%s395 + $0x48] sm:$0xff] %v1718
        %1754 = vst [vmem:[%s395 + $0x50] sm:$0xff] %v1721
        %1755 = vst [vmem:[%s395 + $0x58] sm:$0xff] %v1723
        %1756 = vst [vmem:[%s395 + $0x60] sm:$0xff] %v1726
        %1757 = vst [vmem:[%s395 + $0x68] sm:$0xff] %v1728
        %1758 = vst [vmem:[%s395 + $0x70] sm:$0xff] %v1731
        %1759 = vst [vmem:[%s395 + $0x78] sm:$0xff] %v1733
        %1760 = vst [vmem:[%s395 + $0x80] sm:$0xff] %v1736
        %1761 = vst [vmem:[%s395 + $0x88] sm:$0xff] %v1738
        %1762 = vst [vmem:[%s395 + $0x90] sm:$0xff] %v1741
        %s1763 = smul.u32 19, %s24
        %p1764 = scmp.lt.s32.totalorder %s1763, 37
        %s1765 = scalar_select %p1764, %s1763, 37
        %s1766 = smul.addr %s1765, 8
        %s1767 = scalar_lea.vmem %s7, %s1766
        // Predicated region
        $region77: #{_mlp_forward.1} parent=47 // pred_check
          %p1768 = pneg %p194
        $region78: #{_mlp_forward.1} parent=47 // pred_check_branch
          %1770 = sbr.rel (%p1768) target = $region80
        $region79: #{_mlp_forward.1} parent=47 // pred_region
          %s1771 = smul.u32 19, %s24
        $region80: #{_mlp_forward.1} parent=47 // pred_fallthru
          _
      $region48: #{_mlp_forward.1} parent=5 // pred_fallthru
        _
      %p1772 = scmp.le.s32.totalorder 2, %s19
      // Predicated region
      $region81: #{_mlp_forward.1} parent=5 // pred_check
        %p1773 = pneg %p1772
      $region82: #{_mlp_forward.1} parent=5 // pred_check_branch
        %1775 = sbr.rel (%p1773) target = $region84
      $region83: #{_mlp_forward.1} parent=5 // pred_region
        %s1776 = ssub.s32 %s19, 2
        // Predicated region
        $region85: #{_mlp_forward.1} parent=83 // pred_check
          %p1777 = pneg %p200
        $region86: #{_mlp_forward.1} parent=83 // pred_check_branch
          %1779 = sbr.rel (%p1777) target = $region88
        $region87: #{_mlp_forward.1} parent=83 // pred_region
          %s1780 = smul.u32 19, %s25
          %p1781 = scmp.lt.s32.totalorder %s1780, 37
          %s1782 = scalar_select %p1781, %s1780, 37
          %s1783 = smul.addr %s1782, 8
          %s1784 = scalar_lea.vmem %s7, %s1783
        $region88: #{_mlp_forward.1} parent=83 // pred_fallthru
          _
      $region84: #{_mlp_forward.1} parent=5 // pred_fallthru
        _
    $region6: #{_mlp_forward.1} parent=1 // loop_footer
      %s23 = sadd.s32 1, %s19
    $region7: #{_mlp_forward.1} parent=1 // loop_footer_branch
      %18 = sbr.rel target = $region3
    $region8: #{_mlp_forward.1} parent=1 // loop_exit
      _
    %1785 = vsyncpa [#allocation3], 1
    %s1786 = scalar_lea.sflag [#allocation3], 1
    %1787 = vsyncpa %s1786, 1
    %1788 = vsyncpa [#allocation5], 1
    %1789 = vsyncpa [#allocation8], 1
    %1790 = vsyncpa [#allocation11], 1

</llo_original>
